<compile_context>
chip_gen: v6e
topology: v6e:2x2x1
jax: 0.10.0
libtpu: 0.0.40
codegen_flags: <defaults>
</compile_context>

<pallas_src>
import jax
import jax.numpy as jnp
import numpy as np
from jax.experimental import pallas as pl
from jax.experimental.pallas import tpu as pltpu

EPS = 1e-5                       # nn.BatchNorm2d default eps
VMEM_LIMIT = 32 * 1024 * 1024    # safe on v5e/v6e (128 MiB) and v7x (64 MiB/TC)

MM_TM_PREF = 512                 # matmul M tile preference
MM_TK_PREF = 512                 # matmul K tile preference
ROWS_PREF = 512                  # row tile for stats / activation passes


# ------------------------------ helpers ------------------------------------ #
def _round_up(x, m):
    return (x + m - 1) // m * m


def _pad_dim(d, pref=512):
    """Pad a matmul dim to a multiple of 512 when large (else 128)."""
    return _round_up(d, pref if d >= pref else 128)


def _pick_tile(dim, pref, quantum=128):
    """Largest multiple of `quantum` that divides `dim` and is <= pref."""
    best = quantum
    t = quantum
    while t <= min(dim, pref):
        if dim % t == 0:
            best = t
        t += quantum
    return best


# ------------------------------ kernels ------------------------------------ #
def _stats_kernel(x_ref, sum_ref, ssq_ref):
    """Per-lane sum / sum-of-squares; output block is grid-resident."""
    @pl.when(pl.program_id(0) == 0)
    def _init():
        sum_ref[...] = jnp.zeros_like(sum_ref)
        ssq_ref[...] = jnp.zeros_like(ssq_ref)

    x = x_ref[...]
    sum_ref[...] += jnp.sum(x, axis=0, keepdims=True)
    ssq_ref[...] += jnp.sum(x * x, axis=0, keepdims=True)


def _bn_act_kernel(x_ref, shift_ref, scale_ref, o_ref):
    """round(relu6((x - mean) * rsqrt(var+eps))) -> bf16 (exact ints 0..6)."""
    y = (x_ref[...] - shift_ref[...]) * scale_ref[...]
    o_ref[...] = jnp.round(jnp.clip(y, 0.0, 6.0)).astype(o_ref.dtype)


def _mm_stats_kernel(a_ref, b_ref, o_ref, sum_ref, ssq_ref, acc_ref):
    """o = A @ B (bf16 MXU, f32 acc) + fused per-channel sum/ssq of o (bn1)."""
    i = pl.program_id(0)
    k = pl.program_id(1)

    @pl.when(k == 0)
    def _init():
        acc_ref[...] = jnp.zeros_like(acc_ref)

    acc_ref[...] += jnp.dot(a_ref[...], b_ref[...],
                            preferred_element_type=jnp.float32)

    @pl.when(k == pl.num_programs(1) - 1)
    def _finalize():
        h = acc_ref[...]
        o_ref[...] = h.astype(o_ref.dtype)
        s = jnp.sum(h, axis=0, keepdims=True)
        q = jnp.sum(h * h, axis=0, keepdims=True)

        @pl.when(i == 0)
        def _first():
            sum_ref[...] = s
            ssq_ref[...] = q

        @pl.when(i != 0)
        def _rest():
            sum_ref[...] += s
            ssq_ref[...] += q


def _mm_res_kernel(a_ref, b_ref, r_ref, o_ref, acc_ref):
    """o = A @ B with the avg-pool residual VPU-added into the first lanes."""
    k = pl.program_id(1)

    @pl.when(k == 0)
    def _init():
        acc_ref[...] = jnp.zeros_like(acc_ref)

    acc_ref[...] += jnp.dot(a_ref[...], b_ref[...],
                            preferred_element_type=jnp.float32)

    @pl.when(k == pl.num_programs(1) - 1)
    def _finalize():
        cw = r_ref.shape[1]                       # static, multiple of 128
        acc_ref[:, 0:cw] += r_ref[...]            # direct VPU add (no scatter)
        o_ref[...] = acc_ref[...].astype(o_ref.dtype)


# --------------------------- pallas_call wrappers --------------------------- #
def _channel_stats(xf, rows_tile):
    rows, width = xf.shape
    return pl.pallas_call(
        _stats_kernel,
        out_shape=(jax.ShapeDtypeStruct((1, width), jnp.float32),
                   jax.ShapeDtypeStruct((1, width), jnp.float32)),
        grid_spec=pltpu.PrefetchScalarGridSpec(
            num_scalar_prefetch=0,
            grid=(rows // rows_tile,),
            in_specs=[pl.BlockSpec((rows_tile, width), lambda i: (i, 0))],
            out_specs=(pl.BlockSpec((1, width), lambda i: (0, 0)),
                       pl.BlockSpec((1, width), lambda i: (0, 0)))),
        compiler_params=pltpu.CompilerParams(
            dimension_semantics=("arbitrary",),
            vmem_limit_bytes=VMEM_LIMIT),
    )(xf)


def _bn_act(xf, shift, scale, rows_tile):
    rows, width = xf.shape
    return pl.pallas_call(
        _bn_act_kernel,
        out_shape=jax.ShapeDtypeStruct((rows, width), jnp.bfloat16),
        grid_spec=pltpu.PrefetchScalarGridSpec(
            num_scalar_prefetch=0,
            grid=(rows // rows_tile,),
            in_specs=[pl.BlockSpec((rows_tile, width), lambda i: (i, 0)),
                      pl.BlockSpec((1, width), lambda i: (0, 0)),
                      pl.BlockSpec((1, width), lambda i: (0, 0))],
            out_specs=pl.BlockSpec((rows_tile, width), lambda i: (i, 0))),
        compiler_params=pltpu.CompilerParams(
            dimension_semantics=("parallel",),
            vmem_limit_bytes=VMEM_LIMIT),
    )(xf, shift, scale)


def _conv_matmul_stats(a, b):
    """h0 = A @ B plus fused bn1 per-channel sum / sum-of-squares outputs."""
    mpad, kpad = a.shape
    npad = b.shape[1]
    tm = _pick_tile(mpad, MM_TM_PREF)
    tk = _pick_tile(kpad, MM_TK_PREF)
    grid = (mpad // tm, kpad // tk)
    cost = pl.CostEstimate(
        flops=2 * mpad * npad * kpad + 3 * mpad * npad,
        transcendentals=0,
        bytes_accessed=(2 * mpad * kpad                 # A read exactly once (full-N tile)
                        + 2 * kpad * npad * grid[0]     # B re-read per M tile
                        + 4 * mpad * npad + 8 * npad))
    return pl.pallas_call(
        _mm_stats_kernel,
        out_shape=(jax.ShapeDtypeStruct((mpad, npad), jnp.float32),
                   jax.ShapeDtypeStruct((1, npad), jnp.float32),
                   jax.ShapeDtypeStruct((1, npad), jnp.float32)),
        grid_spec=pltpu.PrefetchScalarGridSpec(
            num_scalar_prefetch=0,
            grid=grid,
            in_specs=[pl.BlockSpec((tm, tk), lambda i, k: (i, k)),
                      pl.BlockSpec((tk, npad), lambda i, k: (k, 0))],
            out_specs=(pl.BlockSpec((tm, npad), lambda i, k: (i, 0)),
                       pl.BlockSpec((1, npad), lambda i, k: (0, 0)),
                       pl.BlockSpec((1, npad), lambda i, k: (0, 0))),
            scratch_shapes=[pltpu.VMEM((tm, npad), jnp.float32)]),
        compiler_params=pltpu.CompilerParams(
            # M axis must stay sequential: the fused bn1 stats accumulate
            # across M tiles (mem-bound kernel, so the lost megacore split on
            # v7x costs little).
            dimension_semantics=("arbitrary", "arbitrary"),
            vmem_limit_bytes=VMEM_LIMIT),
        cost_estimate=cost,
    )(a, b)


def _conv_matmul_res(a, b, residual):
    """out = A @ B with the (mpad, rpad) residual fused into the epilogue."""
    mpad, kpad = a.shape
    npad = b.shape[1]
    rpad = residual.shape[1]
    assert rpad <= npad
    tm = _pick_tile(mpad, MM_TM_PREF)
    tk = _pick_tile(kpad, MM_TK_PREF)
    grid = (mpad // tm, kpad // tk)
    cost = pl.CostEstimate(
        flops=2 * mpad * npad * kpad + mpad * rpad,
        transcendentals=0,
        bytes_accessed=(2 * mpad * kpad + 2 * kpad * npad * grid[0]
                        + 4 * mpad * npad + 4 * mpad * rpad))
    return pl.pallas_call(
        _mm_res_kernel,
        out_shape=jax.ShapeDtypeStruct((mpad, npad), jnp.float32),
        grid_spec=pltpu.PrefetchScalarGridSpec(
            num_scalar_prefetch=0,
            grid=grid,
            in_specs=[pl.BlockSpec((tm, tk), lambda i, k: (i, k)),
                      pl.BlockSpec((tk, npad), lambda i, k: (k, 0)),
                      pl.BlockSpec((tm, rpad), lambda i, k: (i, 0))],
            out_specs=pl.BlockSpec((tm, npad), lambda i, k: (i, 0)),
            scratch_shapes=[pltpu.VMEM((tm, npad), jnp.float32)]),
        compiler_params=pltpu.CompilerParams(
            dimension_semantics=("parallel", "arbitrary"),
            vmem_limit_bytes=VMEM_LIMIT),
        cost_estimate=cost,
    )(a, b, residual)


# ------------------------------ JAX glue ------------------------------------ #
def _fold_rows(x2d, row_tile=ROWS_PREF):
    """(R, C) -> lane-dense (Rf, kfold*C) (layout-preserving reshape), rows
    zero-padded to a multiple of the row tile (zeros do not perturb sums)."""
    r, c = x2d.shape
    kfold = 128 // c if (c < 128 and 128 % c == 0) else 1
    rp = _round_up(r, kfold)
    xf = jnp.pad(x2d, ((0, rp - r), (0, 0))).reshape(rp // kfold, kfold * c)
    rows = xf.shape[0]
    tile = _round_up(rows, 8) if rows <= 2 * row_tile else row_tile
    rows_p = _round_up(rows, tile)
    xf = jnp.pad(xf, ((0, rows_p - rows), (0, 0)))
    return xf, kfold, tile


def _im2col3x3(xp, ho, wo, stride):
    """xp: spatially zero-padded (N, Hp, Wp, C) -> (N*ho*wo, 9*C), tap-major."""
    n, _, _, c = xp.shape
    taps = [xp[:, di:di + stride * ho:stride, dj:dj + stride * wo:stride, :]
            for di in range(3) for dj in range(3)]
    cols = jnp.stack(taps, axis=3)                          # (N, ho, wo, 9, C)
    return cols.reshape(n * ho * wo, 9 * c)


@jax.jit
def downsample_block(x_nhwc, w0_hwio, w1_hwio):
    """Forward of DownsampleBlock (dropit=None). NHWC in/out, HWIO weights."""
    n, h, w, c0 = x_nhwc.shape
    c1 = w0_hwio.shape[-1]
    ho = (h + 2 - 3) // 2 + 1
    wo = (w + 2 - 3) // 2 + 1
    m = n * ho * wo

    mpad = _pad_dim(m)
    npad = _round_up(c1, 128)
    kpad0 = _pad_dim(9 * c0)
    kpad1 = _pad_dim(9 * c1)

    # ---- bn0: lane-folded stats + bf16 activation on the un-expanded input --
    rows0 = n * h * w
    xf, kf0, tile0 = _fold_rows(x_nhwc.reshape(rows0, c0))
    s0, q0 = _channel_stats(xf, tile0)
    s0 = s0.reshape(kf0, c0).sum(axis=0)
    q0 = q0.reshape(kf0, c0).sum(axis=0)
    mean0 = s0 / rows0
    var0 = jnp.maximum(q0 / rows0 - mean0 * mean0, 0.0)
    inv0 = jax.lax.rsqrt(var0 + EPS)
    shift0 = jnp.tile(mean0, kf0)[None, :]
    scale0 = jnp.tile(inv0, kf0)[None, :]
    xact = _bn_act(xf, shift0, scale0, tile0)               # bf16, folded
    xact = xact.reshape(-1, c0)[:rows0].reshape(n, h, w, c0)

    # ---- conv0: act(x) * W0, 3x3, stride 2, pad 1 (zero pad after act) ------
    xpad = jnp.pad(xact, ((0, 0), (1, 1), (1, 1), (0, 0)))  # literal 0 border
    a0 = _im2col3x3(xpad, ho, wo, stride=2)                 # (m, 9*c0) bf16
    a0 = jnp.pad(a0, ((0, mpad - m), (0, kpad0 - 9 * c0)))
    w0 = jnp.pad(w0_hwio.reshape(9 * c0, c1),
                 ((0, kpad0 - 9 * c0), (0, npad - c1))).astype(jnp.bfloat16)
    h0, s1, q1 = _conv_matmul_stats(a0, w0)                 # bn1 stats fused

    # ---- bn1: stats already accumulated in the conv0 epilogue ---------------
    s1 = s1[0, :c1]
    q1 = q1[0, :c1]
    mean1 = s1 / m
    var1 = jnp.maximum(q1 / m - mean1 * mean1, 0.0)
    inv1 = jax.lax.rsqrt(var1 + EPS)
    shift1 = jnp.pad(mean1, (0, npad - c1))[None, :]
    scale1 = jnp.pad(inv1, (0, npad - c1))[None, :]
    h0act = _bn_act(h0, shift1, scale1, _pick_tile(mpad, ROWS_PREF))  # bf16

    # ---- conv1: act(h0) * W1, 3x3, stride 1, pad 1 + fused residual ---------
    h0img = h0act[:m, :c1].reshape(n, ho, wo, c1)
    h0pad = jnp.pad(h0img, ((0, 0), (1, 1), (1, 1), (0, 0)))
    a1 = _im2col3x3(h0pad, ho, wo, stride=1)                # (m, 9*c1) bf16
    a1 = jnp.pad(a1, ((0, mpad - m), (0, kpad1 - 9 * c1)))
    w1 = jnp.pad(w1_hwio.reshape(9 * c1, c1),
                 ((0, kpad1 - 9 * c1), (0, npad - c1))).astype(jnp.bfloat16)

    # avg_pool2d(x, 3, stride=2, pad=1), count_include_pad=True, straight from
    # the raw input (single read) rather than from the im2col expansion.
    # TODO(synk): pooling stays on the XLA side (lax.reduce_window).
    pool = jax.lax.reduce_window(
        x_nhwc, 0.0, jax.lax.add, (1, 3, 3, 1), (1, 2, 2, 1),
        ((0, 0), (1, 1), (1, 1), (0, 0))) / 9.0             # (n, ho, wo, c0)
    rpad = _round_up(c0, 128)
    res = jnp.pad(pool.reshape(m, c0), ((0, mpad - m), (0, rpad - c0)))

    out = _conv_matmul_res(a1, w1, res)                     # (mpad, npad) f32
    return out[:m, :c1].reshape(n, ho, wo, c1)


# --------------------------- pure-JAX reference ----------------------------- #
def reference(x_nhwc, w0, w1):
    def bn_act_ref(x):
        mean = x.mean(axis=(0, 1, 2), keepdims=True)
        var = ((x - mean) ** 2).mean(axis=(0, 1, 2), keepdims=True)
        return jnp.round(jnp.clip((x - mean) * jax.lax.rsqrt(var + EPS), 0.0, 6.0))

    dn = ("NHWC", "HWIO", "NHWC")
    h = jax.lax.conv_general_dilated(
        bn_act_ref(x_nhwc), w0, (2, 2), ((1, 1), (1, 1)),
        dimension_numbers=jax.lax.conv_dimension_numbers(x_nhwc.shape, w0.shape, dn))
    h = jax.lax.conv_general_dilated(
        bn_act_ref(h), w1, (1, 1), ((1, 1), (1, 1)),
        dimension_numbers=jax.lax.conv_dimension_numbers(h.shape, w1.shape, dn))
    pool = jax.lax.reduce_window(
        x_nhwc, 0.0, jax.lax.add, (1, 3, 3, 1), (1, 2, 2, 1),
        ((0, 0), (1, 1), (1, 1), (0, 0))) / 9.0
    pool = jnp.concatenate([pool, jnp.zeros_like(pool)], axis=-1)
    return pool + h


# ----------------------------------- main ----------------------------------- #
if __name__ == "__main__":
    key = jax.random.PRNGKey(0)
    kx, kw0, kw1 = jax.random.split(key, 3)

    batch, width, hw = 2, 8, 16
    c0, c1 = width // 2, width                              # 4, 8

    # PyTorch-style NCHW input, transposed to the kernel's NHWC layout.
    x_nchw = jax.random.normal(kx, (batch, c0, hw, hw), jnp.float32)
    x_nhwc = jnp.transpose(x_nchw, (0, 2, 3, 1))

    # Deterministic conv weights (kaiming_normal fan_out scaling), HWIO layout.
    std = float(np.sqrt(2.0 / (c1 * 3 * 3)))
    w0 = jax.random.normal(kw0, (3, 3, c0, c1), jnp.float32) * std
    w1 = jax.random.normal(kw1, (3, 3, c1, c1), jnp.float32) * std
    # The kernel feeds the MXU bf16 operands; quantize the weights once so the
    # reference uses identical values (activations are exact 0..6 integers).
    w0 = w0.astype(jnp.bfloat16).astype(jnp.float32)
    w1 = w1.astype(jnp.bfloat16).astype(jnp.float32)

    out = jax.block_until_ready(downsample_block(x_nhwc, w0, w1))
    ref = jax.block_until_ready(reference(x_nhwc, w0, w1))
    np.testing.assert_allclose(np.asarray(out), np.asarray(ref),
                               rtol=1e-3, atol=1e-3)

    out_nchw = jnp.transpose(out, (0, 3, 1, 2))             # back to NCHW
    assert out_nchw.shape == (batch, width, hw // 2, hw // 2)
    print("KERNEL_OK")
</pallas_src>

<mosaic_0001>
module attributes {stable_mosaic.version = 11 : i64} {
  func.func @_stats_kernel(%arg0: i32, %arg1: memref<16x128xf32, #tpu.memory_space<vmem>>, %arg2: memref<1x128xf32, #tpu.memory_space<vmem>>, %arg3: memref<1x128xf32, #tpu.memory_space<vmem>>) attributes {dimension_semantics = [#tpu.dimension_semantics<arbitrary>], iteration_bounds = array<i64: 1>, scalar_prefetch = 0 : i64, scratch_operands = 0 : i64, tpu.core_type = #tpu.core_type<tc>, window_params = [{transform_indices = @transform_0, window_bounds = array<i64: 16, 128>}, {pipeline_mode = #tpu.pipeline_mode<synchronous>, transform_indices = @transform_1, window_bounds = array<i64: 1, 128>}, {pipeline_mode = #tpu.pipeline_mode<synchronous>, transform_indices = @transform_2, window_bounds = array<i64: 1, 128>}]} {
    %c0_i32 = arith.constant 0 : i32
    %0 = arith.cmpi eq, %arg0, %c0_i32 : i32
    %1 = arith.extui %0 : i1 to i32
    %c0_i32_0 = arith.constant 0 : i32
    %2 = arith.cmpi ne, %1, %c0_i32_0 : i32
    scf.if %2 {
      %cst_11 = arith.constant 0.000000e+00 : f32
      %15 = vector.broadcast %cst_11 : f32 to vector<1x128xf32>
      %c0_12 = arith.constant 0 : index
      %c0_13 = arith.constant 0 : index
      %16 = vector.load %arg2[%c0_12, %c0_13] : memref<1x128xf32, #tpu.memory_space<vmem>>, vector<1x128xf32>
      tpu.vector_store %arg2[%c0_12, %c0_13], %15 {strides = array<i32>} : memref<1x128xf32, #tpu.memory_space<vmem>>, vector<1x128xf32>,
      %cst_14 = arith.constant 0.000000e+00 : f32
      %17 = vector.broadcast %cst_14 : f32 to vector<1x128xf32>
      %c0_15 = arith.constant 0 : index
      %c0_16 = arith.constant 0 : index
      %18 = vector.load %arg3[%c0_15, %c0_16] : memref<1x128xf32, #tpu.memory_space<vmem>>, vector<1x128xf32>
      tpu.vector_store %arg3[%c0_15, %c0_16], %17 {strides = array<i32>} : memref<1x128xf32, #tpu.memory_space<vmem>>, vector<1x128xf32>,
    } else {
    }
    %c0 = arith.constant 0 : index
    %c0_1 = arith.constant 0 : index
    %3 = vector.load %arg1[%c0, %c0_1] : memref<16x128xf32, #tpu.memory_space<vmem>>, vector<16x128xf32>
    %c0_2 = arith.constant 0 : index
    %c0_3 = arith.constant 0 : index
    %4 = vector.load %arg2[%c0_2, %c0_3] : memref<1x128xf32, #tpu.memory_space<vmem>>, vector<1x128xf32>
    %cst = arith.constant dense<0.000000e+00> : vector<128xf32>
    %5 = vector.multi_reduction <add>, %3, %cst [0] : vector<16x128xf32> to vector<128xf32>
    %6 = vector.shape_cast %5 : vector<128xf32> to vector<1x128xf32>
    %7 = arith.addf %4, %6 : vector<1x128xf32>
    %c0_4 = arith.constant 0 : index
    %c0_5 = arith.constant 0 : index
    %8 = vector.load %arg2[%c0_4, %c0_5] : memref<1x128xf32, #tpu.memory_space<vmem>>, vector<1x128xf32>
    tpu.vector_store %arg2[%c0_4, %c0_5], %7 {strides = array<i32>} : memref<1x128xf32, #tpu.memory_space<vmem>>, vector<1x128xf32>,
    %c0_6 = arith.constant 0 : index
    %c0_7 = arith.constant 0 : index
    %9 = vector.load %arg3[%c0_6, %c0_7] : memref<1x128xf32, #tpu.memory_space<vmem>>, vector<1x128xf32>
    %10 = arith.mulf %3, %3 : vector<16x128xf32>
    %cst_8 = arith.constant dense<0.000000e+00> : vector<128xf32>
    %11 = vector.multi_reduction <add>, %10, %cst_8 [0] : vector<16x128xf32> to vector<128xf32>
    %12 = vector.shape_cast %11 : vector<128xf32> to vector<1x128xf32>
    %13 = arith.addf %9, %12 : vector<1x128xf32>
    %c0_9 = arith.constant 0 : index
    %c0_10 = arith.constant 0 : index
    %14 = vector.load %arg3[%c0_9, %c0_10] : memref<1x128xf32, #tpu.memory_space<vmem>>, vector<1x128xf32>
    tpu.vector_store %arg3[%c0_9, %c0_10], %13 {strides = array<i32>} : memref<1x128xf32, #tpu.memory_space<vmem>>, vector<1x128xf32>,
    return
  }
  func.func @transform_0(%arg0: i32) -> (i32, i32) {
    %c0_i32 = arith.constant 0 : i32
    %c0_i32_0 = arith.constant 0 : i32
    return %arg0, %c0_i32 : i32, i32
  }
  func.func @transform_1(%arg0: i32) -> (i32, i32) {
    %c0_i32 = arith.constant 0 : i32
    %c0_i32_0 = arith.constant 0 : i32
    %c0_i32_1 = arith.constant 0 : i32
    return %c0_i32, %c0_i32_0 : i32, i32
  }
  func.func @transform_2(%arg0: i32) -> (i32, i32) {
    %c0_i32 = arith.constant 0 : i32
    %c0_i32_0 = arith.constant 0 : i32
    %c0_i32_1 = arith.constant 0 : i32
    return %c0_i32, %c0_i32_0 : i32, i32
  }
}

module attributes {stable_mosaic.version = 11 : i64} {
  func.func @_bn_act_kernel(%arg0: i32, %arg1: memref<16x128xf32, #tpu.memory_space<vmem>>, %arg2: memref<1x128xf32, #tpu.memory_space<vmem>>, %arg3: memref<1x128xf32, #tpu.memory_space<vmem>>, %arg4: memref<16x128xbf16, #tpu.memory_space<vmem>>) attributes {dimension_semantics = [#tpu.dimension_semantics<parallel>], iteration_bounds = array<i64: 1>, scalar_prefetch = 0 : i64, scratch_operands = 0 : i64, tpu.core_type = #tpu.core_type<tc>, window_params = [{transform_indices = @transform_0, window_bounds = array<i64: 16, 128>}, {pipeline_mode = #tpu.pipeline_mode<synchronous>, transform_indices = @transform_1, window_bounds = array<i64: 1, 128>}, {pipeline_mode = #tpu.pipeline_mode<synchronous>, transform_indices = @transform_2, window_bounds = array<i64: 1, 128>}, {transform_indices = @transform_3, window_bounds = array<i64: 16, 128>}]} {
    %c0 = arith.constant 0 : index
    %c0_0 = arith.constant 0 : index
    %0 = vector.load %arg1[%c0, %c0_0] : memref<16x128xf32, #tpu.memory_space<vmem>>, vector<16x128xf32>
    %c0_1 = arith.constant 0 : index
    %c0_2 = arith.constant 0 : index
    %1 = vector.load %arg2[%c0_1, %c0_2] : memref<1x128xf32, #tpu.memory_space<vmem>>, vector<1x128xf32>
    %2 = vector.broadcast %1 : vector<1x128xf32> to vector<16x128xf32>
    %3 = arith.subf %0, %2 : vector<16x128xf32>
    %c0_3 = arith.constant 0 : index
    %c0_4 = arith.constant 0 : index
    %4 = vector.load %arg3[%c0_3, %c0_4] : memref<1x128xf32, #tpu.memory_space<vmem>>, vector<1x128xf32>
    %5 = vector.broadcast %4 : vector<1x128xf32> to vector<16x128xf32>
    %6 = arith.mulf %3, %5 : vector<16x128xf32>
    %cst = arith.constant 0.000000e+00 : f32
    %cst_5 = arith.constant 6.000000e+00 : f32
    %7 = vector.broadcast %cst : f32 to vector<16x128xf32>
    %8 = arith.maximumf %7, %6 : vector<16x128xf32>
    %9 = vector.broadcast %cst_5 : f32 to vector<16x128xf32>
    %10 = arith.minimumf %9, %8 : vector<16x128xf32>
    %11 = math.roundeven %10 : vector<16x128xf32>
    %12 = arith.truncf %11 : vector<16x128xf32> to vector<16x128xbf16>
    %c0_6 = arith.constant 0 : index
    %c0_7 = arith.constant 0 : index
    %13 = vector.load %arg4[%c0_6, %c0_7] : memref<16x128xbf16, #tpu.memory_space<vmem>>, vector<16x128xbf16>
    tpu.vector_store %arg4[%c0_6, %c0_7], %12 {strides = array<i32>} : memref<16x128xbf16, #tpu.memory_space<vmem>>, vector<16x128xbf16>,
    return
  }
  func.func @transform_0(%arg0: i32) -> (i32, i32) {
    %c0_i32 = arith.constant 0 : i32
    %c0_i32_0 = arith.constant 0 : i32
    return %arg0, %c0_i32 : i32, i32
  }
  func.func @transform_1(%arg0: i32) -> (i32, i32) {
    %c0_i32 = arith.constant 0 : i32
    %c0_i32_0 = arith.constant 0 : i32
    %c0_i32_1 = arith.constant 0 : i32
    return %c0_i32, %c0_i32_0 : i32, i32
  }
  func.func @transform_2(%arg0: i32) -> (i32, i32) {
    %c0_i32 = arith.constant 0 : i32
    %c0_i32_0 = arith.constant 0 : i32
    %c0_i32_1 = arith.constant 0 : i32
    return %c0_i32, %c0_i32_0 : i32, i32
  }
  func.func @transform_3(%arg0: i32) -> (i32, i32) {
    %c0_i32 = arith.constant 0 : i32
    %c0_i32_0 = arith.constant 0 : i32
    return %arg0, %c0_i32 : i32, i32
  }
}

module attributes {stable_mosaic.version = 11 : i64} {
  func.func @_mm_stats_kernel(%arg0: i32, %arg1: i32, %arg2: memref<128x128xbf16, #tpu.memory_space<vmem>>, %arg3: memref<128x128xbf16, #tpu.memory_space<vmem>>, %arg4: memref<128x128xf32, #tpu.memory_space<vmem>>, %arg5: memref<1x128xf32, #tpu.memory_space<vmem>>, %arg6: memref<1x128xf32, #tpu.memory_space<vmem>>, %arg7: memref<128x128xf32, #tpu.memory_space<vmem>>) attributes {dimension_semantics = [#tpu.dimension_semantics<arbitrary>, #tpu.dimension_semantics<arbitrary>], iteration_bounds = array<i64: 1, 1>, scalar_prefetch = 0 : i64, scratch_operands = 1 : i64, tpu.core_type = #tpu.core_type<tc>, window_params = [{transform_indices = @transform_0, window_bounds = array<i64: 128, 128>}, {transform_indices = @transform_1, window_bounds = array<i64: 128, 128>}, {transform_indices = @transform_2, window_bounds = array<i64: 128, 128>}, {pipeline_mode = #tpu.pipeline_mode<synchronous>, transform_indices = @transform_3, window_bounds = array<i64: 1, 128>}, {pipeline_mode = #tpu.pipeline_mode<synchronous>, transform_indices = @transform_4, window_bounds = array<i64: 1, 128>}]} {
    %c0_i32 = arith.constant 0 : i32
    %0 = arith.cmpi eq, %arg1, %c0_i32 : i32
    %1 = arith.extui %0 : i1 to i32
    %c0_i32_0 = arith.constant 0 : i32
    %2 = arith.cmpi ne, %1, %c0_i32_0 : i32
    scf.if %2 {
      %cst_10 = arith.constant 0.000000e+00 : f32
      %12 = vector.broadcast %cst_10 : f32 to vector<128x128xf32>
      %c0_11 = arith.constant 0 : index
      %c0_12 = arith.constant 0 : index
      %13 = vector.load %arg7[%c0_11, %c0_12] : memref<128x128xf32, #tpu.memory_space<vmem>>, vector<128x128xf32>
      tpu.vector_store %arg7[%c0_11, %c0_12], %12 {strides = array<i32>} : memref<128x128xf32, #tpu.memory_space<vmem>>, vector<128x128xf32>,
    } else {
    }
    %c0 = arith.constant 0 : index
    %c0_1 = arith.constant 0 : index
    %3 = vector.load %arg7[%c0, %c0_1] : memref<128x128xf32, #tpu.memory_space<vmem>>, vector<128x128xf32>
    %c0_2 = arith.constant 0 : index
    %c0_3 = arith.constant 0 : index
    %4 = vector.load %arg2[%c0_2, %c0_3] : memref<128x128xbf16, #tpu.memory_space<vmem>>, vector<128x128xbf16>
    %c0_4 = arith.constant 0 : index
    %c0_5 = arith.constant 0 : index
    %5 = vector.load %arg3[%c0_4, %c0_5] : memref<128x128xbf16, #tpu.memory_space<vmem>>, vector<128x128xbf16>
    %cst = arith.constant dense<0.000000e+00> : vector<128x128xf32>
    %6 = tpu.matmul %4, %5, %cst {dimension_numbers = #tpu.dot_dimension_numbers<[1], [0], [0], [1], [0, 0, 1, 1], [], []>} : vector<128x128xbf16>, vector<128x128xbf16>, vector<128x128xf32> -> vector<128x128xf32>
    %7 = arith.addf %3, %6 : vector<128x128xf32>
    %c0_6 = arith.constant 0 : index
    %c0_7 = arith.constant 0 : index
    %8 = vector.load %arg7[%c0_6, %c0_7] : memref<128x128xf32, #tpu.memory_space<vmem>>, vector<128x128xf32>
    tpu.vector_store %arg7[%c0_6, %c0_7], %7 {strides = array<i32>} : memref<128x128xf32, #tpu.memory_space<vmem>>, vector<128x128xf32>,
    %c0_i32_8 = arith.constant 0 : i32
    %9 = arith.cmpi eq, %arg1, %c0_i32_8 : i32
    %10 = arith.extui %9 : i1 to i32
    %c0_i32_9 = arith.constant 0 : i32
    %11 = arith.cmpi ne, %10, %c0_i32_9 : i32
    scf.if %11 {
      %c0_10 = arith.constant 0 : index
      %c0_11 = arith.constant 0 : index
      %12 = vector.load %arg7[%c0_10, %c0_11] : memref<128x128xf32, #tpu.memory_space<vmem>>, vector<128x128xf32>
      %c0_12 = arith.constant 0 : index
      %c0_13 = arith.constant 0 : index
      %13 = vector.load %arg4[%c0_12, %c0_13] : memref<128x128xf32, #tpu.memory_space<vmem>>, vector<128x128xf32>
      tpu.vector_store %arg4[%c0_12, %c0_13], %12 {strides = array<i32>} : memref<128x128xf32, #tpu.memory_space<vmem>>, vector<128x128xf32>,
      %cst_14 = arith.constant dense<0.000000e+00> : vector<128xf32>
      %14 = vector.multi_reduction <add>, %12, %cst_14 [0] : vector<128x128xf32> to vector<128xf32>
      %15 = vector.shape_cast %14 : vector<128xf32> to vector<1x128xf32>
      %16 = arith.mulf %12, %12 : vector<128x128xf32>
      %cst_15 = arith.constant dense<0.000000e+00> : vector<128xf32>
      %17 = vector.multi_reduction <add>, %16, %cst_15 [0] : vector<128x128xf32> to vector<128xf32>
      %18 = vector.shape_cast %17 : vector<128xf32> to vector<1x128xf32>
      %c0_i32_16 = arith.constant 0 : i32
      %19 = arith.cmpi eq, %arg0, %c0_i32_16 : i32
      %20 = arith.extui %19 : i1 to i32
      %c0_i32_17 = arith.constant 0 : i32
      %21 = arith.cmpi ne, %20, %c0_i32_17 : i32
      scf.if %21 {
        %c0_20 = arith.constant 0 : index
        %c0_21 = arith.constant 0 : index
        %25 = vector.load %arg5[%c0_20, %c0_21] : memref<1x128xf32, #tpu.memory_space<vmem>>, vector<1x128xf32>
        tpu.vector_store %arg5[%c0_20, %c0_21], %15 {strides = array<i32>} : memref<1x128xf32, #tpu.memory_space<vmem>>, vector<1x128xf32>,
        %c0_22 = arith.constant 0 : index
        %c0_23 = arith.constant 0 : index
        %26 = vector.load %arg6[%c0_22, %c0_23] : memref<1x128xf32, #tpu.memory_space<vmem>>, vector<1x128xf32>
        tpu.vector_store %arg6[%c0_22, %c0_23], %18 {strides = array<i32>} : memref<1x128xf32, #tpu.memory_space<vmem>>, vector<1x128xf32>,
      } else {
      }
      %c0_i32_18 = arith.constant 0 : i32
      %22 = arith.cmpi ne, %arg0, %c0_i32_18 : i32
      %23 = arith.extui %22 : i1 to i32
      %c0_i32_19 = arith.constant 0 : i32
      %24 = arith.cmpi ne, %23, %c0_i32_19 : i32
      scf.if %24 {
        %c0_20 = arith.constant 0 : index
        %c0_21 = arith.constant 0 : index
        %25 = vector.load %arg5[%c0_20, %c0_21] : memref<1x128xf32, #tpu.memory_space<vmem>>, vector<1x128xf32>
        %26 = arith.addf %25, %15 : vector<1x128xf32>
        %c0_22 = arith.constant 0 : index
        %c0_23 = arith.constant 0 : index
        %27 = vector.load %arg5[%c0_22, %c0_23] : memref<1x128xf32, #tpu.memory_space<vmem>>, vector<1x128xf32>
        tpu.vector_store %arg5[%c0_22, %c0_23], %26 {strides = array<i32>} : memref<1x128xf32, #tpu.memory_space<vmem>>, vector<1x128xf32>,
        %c0_24 = arith.constant 0 : index
        %c0_25 = arith.constant 0 : index
        %28 = vector.load %arg6[%c0_24, %c0_25] : memref<1x128xf32, #tpu.memory_space<vmem>>, vector<1x128xf32>
        %29 = arith.addf %28, %18 : vector<1x128xf32>
        %c0_26 = arith.constant 0 : index
        %c0_27 = arith.constant 0 : index
        %30 = vector.load %arg6[%c0_26, %c0_27] : memref<1x128xf32, #tpu.memory_space<vmem>>, vector<1x128xf32>
        tpu.vector_store %arg6[%c0_26, %c0_27], %29 {strides = array<i32>} : memref<1x128xf32, #tpu.memory_space<vmem>>, vector<1x128xf32>,
      } else {
      }
    } else {
    }
    return
  }
  func.func @transform_0(%arg0: i32, %arg1: i32) -> (i32, i32) {
    %c0_i32 = arith.constant 0 : i32
    return %arg0, %arg1 : i32, i32
  }
  func.func @transform_1(%arg0: i32, %arg1: i32) -> (i32, i32) {
    %c0_i32 = arith.constant 0 : i32
    %c0_i32_0 = arith.constant 0 : i32
    return %arg1, %c0_i32 : i32, i32
  }
  func.func @transform_2(%arg0: i32, %arg1: i32) -> (i32, i32) {
    %c0_i32 = arith.constant 0 : i32
    %c0_i32_0 = arith.constant 0 : i32
    return %arg0, %c0_i32 : i32, i32
  }
  func.func @transform_3(%arg0: i32, %arg1: i32) -> (i32, i32) {
    %c0_i32 = arith.constant 0 : i32
    %c0_i32_0 = arith.constant 0 : i32
    %c0_i32_1 = arith.constant 0 : i32
    return %c0_i32, %c0_i32_0 : i32, i32
  }
  func.func @transform_4(%arg0: i32, %arg1: i32) -> (i32, i32) {
    %c0_i32 = arith.constant 0 : i32
    %c0_i32_0 = arith.constant 0 : i32
    %c0_i32_1 = arith.constant 0 : i32
    return %c0_i32, %c0_i32_0 : i32, i32
  }
}

module attributes {stable_mosaic.version = 11 : i64} {
  func.func @_bn_act_kernel(%arg0: i32, %arg1: memref<128x128xf32, #tpu.memory_space<vmem>>, %arg2: memref<1x128xf32, #tpu.memory_space<vmem>>, %arg3: memref<1x128xf32, #tpu.memory_space<vmem>>, %arg4: memref<128x128xbf16, #tpu.memory_space<vmem>>) attributes {dimension_semantics = [#tpu.dimension_semantics<parallel>], iteration_bounds = array<i64: 1>, scalar_prefetch = 0 : i64, scratch_operands = 0 : i64, tpu.core_type = #tpu.core_type<tc>, window_params = [{transform_indices = @transform_0, window_bounds = array<i64: 128, 128>}, {pipeline_mode = #tpu.pipeline_mode<synchronous>, transform_indices = @transform_1, window_bounds = array<i64: 1, 128>}, {pipeline_mode = #tpu.pipeline_mode<synchronous>, transform_indices = @transform_2, window_bounds = array<i64: 1, 128>}, {transform_indices = @transform_3, window_bounds = array<i64: 128, 128>}]} {
    %c0 = arith.constant 0 : index
    %c0_0 = arith.constant 0 : index
    %0 = vector.load %arg1[%c0, %c0_0] : memref<128x128xf32, #tpu.memory_space<vmem>>, vector<128x128xf32>
    %c0_1 = arith.constant 0 : index
    %c0_2 = arith.constant 0 : index
    %1 = vector.load %arg2[%c0_1, %c0_2] : memref<1x128xf32, #tpu.memory_space<vmem>>, vector<1x128xf32>
    %2 = vector.broadcast %1 : vector<1x128xf32> to vector<128x128xf32>
    %3 = arith.subf %0, %2 : vector<128x128xf32>
    %c0_3 = arith.constant 0 : index
    %c0_4 = arith.constant 0 : index
    %4 = vector.load %arg3[%c0_3, %c0_4] : memref<1x128xf32, #tpu.memory_space<vmem>>, vector<1x128xf32>
    %5 = vector.broadcast %4 : vector<1x128xf32> to vector<128x128xf32>
    %6 = arith.mulf %3, %5 : vector<128x128xf32>
    %cst = arith.constant 0.000000e+00 : f32
    %cst_5 = arith.constant 6.000000e+00 : f32
    %7 = vector.broadcast %cst : f32 to vector<128x128xf32>
    %8 = arith.maximumf %7, %6 : vector<128x128xf32>
    %9 = vector.broadcast %cst_5 : f32 to vector<128x128xf32>
    %10 = arith.minimumf %9, %8 : vector<128x128xf32>
    %11 = math.roundeven %10 : vector<128x128xf32>
    %12 = arith.truncf %11 : vector<128x128xf32> to vector<128x128xbf16>
    %c0_6 = arith.constant 0 : index
    %c0_7 = arith.constant 0 : index
    %13 = vector.load %arg4[%c0_6, %c0_7] : memref<128x128xbf16, #tpu.memory_space<vmem>>, vector<128x128xbf16>
    tpu.vector_store %arg4[%c0_6, %c0_7], %12 {strides = array<i32>} : memref<128x128xbf16, #tpu.memory_space<vmem>>, vector<128x128xbf16>,
    return
  }
  func.func @transform_0(%arg0: i32) -> (i32, i32) {
    %c0_i32 = arith.constant 0 : i32
    %c0_i32_0 = arith.constant 0 : i32
    return %arg0, %c0_i32 : i32, i32
  }
  func.func @transform_1(%arg0: i32) -> (i32, i32) {
    %c0_i32 = arith.constant 0 : i32
    %c0_i32_0 = arith.constant 0 : i32
    %c0_i32_1 = arith.constant 0 : i32
    return %c0_i32, %c0_i32_0 : i32, i32
  }
  func.func @transform_2(%arg0: i32) -> (i32, i32) {
    %c0_i32 = arith.constant 0 : i32
    %c0_i32_0 = arith.constant 0 : i32
    %c0_i32_1 = arith.constant 0 : i32
    return %c0_i32, %c0_i32_0 : i32, i32
  }
  func.func @transform_3(%arg0: i32) -> (i32, i32) {
    %c0_i32 = arith.constant 0 : i32
    %c0_i32_0 = arith.constant 0 : i32
    return %arg0, %c0_i32 : i32, i32
  }
}

module attributes {stable_mosaic.version = 11 : i64} {
  func.func @_mm_res_kernel(%arg0: i32, %arg1: i32, %arg2: memref<128x128xbf16, #tpu.memory_space<vmem>>, %arg3: memref<128x128xbf16, #tpu.memory_space<vmem>>, %arg4: memref<128x128xf32, #tpu.memory_space<vmem>>, %arg5: memref<128x128xf32, #tpu.memory_space<vmem>>, %arg6: memref<128x128xf32, #tpu.memory_space<vmem>>) attributes {dimension_semantics = [#tpu.dimension_semantics<parallel>, #tpu.dimension_semantics<arbitrary>], iteration_bounds = array<i64: 1, 1>, scalar_prefetch = 0 : i64, scratch_operands = 1 : i64, tpu.core_type = #tpu.core_type<tc>, window_params = [{transform_indices = @transform_0, window_bounds = array<i64: 128, 128>}, {transform_indices = @transform_1, window_bounds = array<i64: 128, 128>}, {transform_indices = @transform_2, window_bounds = array<i64: 128, 128>}, {transform_indices = @transform_3, window_bounds = array<i64: 128, 128>}]} {
    %c0_i32 = arith.constant 0 : i32
    %0 = arith.cmpi eq, %arg1, %c0_i32 : i32
    %1 = arith.extui %0 : i1 to i32
    %c0_i32_0 = arith.constant 0 : i32
    %2 = arith.cmpi ne, %1, %c0_i32_0 : i32
    scf.if %2 {
      %cst_10 = arith.constant 0.000000e+00 : f32
      %12 = vector.broadcast %cst_10 : f32 to vector<128x128xf32>
      %c0_11 = arith.constant 0 : index
      %c0_12 = arith.constant 0 : index
      %13 = vector.load %arg6[%c0_11, %c0_12] : memref<128x128xf32, #tpu.memory_space<vmem>>, vector<128x128xf32>
      tpu.vector_store %arg6[%c0_11, %c0_12], %12 {strides = array<i32>} : memref<128x128xf32, #tpu.memory_space<vmem>>, vector<128x128xf32>,
    } else {
    }
    %c0 = arith.constant 0 : index
    %c0_1 = arith.constant 0 : index
    %3 = vector.load %arg6[%c0, %c0_1] : memref<128x128xf32, #tpu.memory_space<vmem>>, vector<128x128xf32>
    %c0_2 = arith.constant 0 : index
    %c0_3 = arith.constant 0 : index
    %4 = vector.load %arg2[%c0_2, %c0_3] : memref<128x128xbf16, #tpu.memory_space<vmem>>, vector<128x128xbf16>
    %c0_4 = arith.constant 0 : index
    %c0_5 = arith.constant 0 : index
    %5 = vector.load %arg3[%c0_4, %c0_5] : memref<128x128xbf16, #tpu.memory_space<vmem>>, vector<128x128xbf16>
    %cst = arith.constant dense<0.000000e+00> : vector<128x128xf32>
    %6 = tpu.matmul %4, %5, %cst {dimension_numbers = #tpu.dot_dimension_numbers<[1], [0], [0], [1], [0, 0, 1, 1], [], []>} : vector<128x128xbf16>, vector<128x128xbf16>, vector<128x128xf32> -> vector<128x128xf32>
    %7 = arith.addf %3, %6 : vector<128x128xf32>
    %c0_6 = arith.constant 0 : index
    %c0_7 = arith.constant 0 : index
    %8 = vector.load %arg6[%c0_6, %c0_7] : memref<128x128xf32, #tpu.memory_space<vmem>>, vector<128x128xf32>
    tpu.vector_store %arg6[%c0_6, %c0_7], %7 {strides = array<i32>} : memref<128x128xf32, #tpu.memory_space<vmem>>, vector<128x128xf32>,
    %c0_i32_8 = arith.constant 0 : i32
    %9 = arith.cmpi eq, %arg1, %c0_i32_8 : i32
    %10 = arith.extui %9 : i1 to i32
    %c0_i32_9 = arith.constant 0 : i32
    %11 = arith.cmpi ne, %10, %c0_i32_9 : i32
    scf.if %11 {
      %c0_10 = arith.constant 0 : index
      %c0_11 = arith.constant 0 : index
      %12 = vector.load %arg6[%c0_10, %c0_11] : memref<128x128xf32, #tpu.memory_space<vmem>>, vector<128x128xf32>
      %c0_12 = arith.constant 0 : index
      %c0_13 = arith.constant 0 : index
      %13 = vector.load %arg4[%c0_12, %c0_13] : memref<128x128xf32, #tpu.memory_space<vmem>>, vector<128x128xf32>
      %14 = arith.addf %12, %13 : vector<128x128xf32>
      %c0_14 = arith.constant 0 : index
      %c0_15 = arith.constant 0 : index
      %15 = vector.load %arg6[%c0_14, %c0_15] : memref<128x128xf32, #tpu.memory_space<vmem>>, vector<128x128xf32>
      tpu.vector_store %arg6[%c0_14, %c0_15], %14 {strides = array<i32>} : memref<128x128xf32, #tpu.memory_space<vmem>>, vector<128x128xf32>,
      %c0_16 = arith.constant 0 : index
      %c0_17 = arith.constant 0 : index
      %16 = vector.load %arg6[%c0_16, %c0_17] : memref<128x128xf32, #tpu.memory_space<vmem>>, vector<128x128xf32>
      %c0_18 = arith.constant 0 : index
      %c0_19 = arith.constant 0 : index
      %17 = vector.load %arg5[%c0_18, %c0_19] : memref<128x128xf32, #tpu.memory_space<vmem>>, vector<128x128xf32>
      tpu.vector_store %arg5[%c0_18, %c0_19], %16 {strides = array<i32>} : memref<128x128xf32, #tpu.memory_space<vmem>>, vector<128x128xf32>,
    } else {
    }
    return
  }
  func.func @transform_0(%arg0: i32, %arg1: i32) -> (i32, i32) {
    %c0_i32 = arith.constant 0 : i32
    return %arg0, %arg1 : i32, i32
  }
  func.func @transform_1(%arg0: i32, %arg1: i32) -> (i32, i32) {
    %c0_i32 = arith.constant 0 : i32
    %c0_i32_0 = arith.constant 0 : i32
    return %arg1, %c0_i32 : i32, i32
  }
  func.func @transform_2(%arg0: i32, %arg1: i32) -> (i32, i32) {
    %c0_i32 = arith.constant 0 : i32
    %c0_i32_0 = arith.constant 0 : i32
    return %arg0, %c0_i32 : i32, i32
  }
  func.func @transform_3(%arg0: i32, %arg1: i32) -> (i32, i32) {
    %c0_i32 = arith.constant 0 : i32
    %c0_i32_0 = arith.constant 0 : i32
    return %arg0, %c0_i32 : i32, i32
  }
}

</mosaic_0001>

<llo_original>
// kernel: tile.13
$region0: #{tile.13}
  #allocation0 [shape = 's32[1]{0}', space=sflag, size = 0x4, scoped, tag = 'scoped memory for tile.13']
  %s0 = inlined_call_operand.vmem [shape: f32[4], index: 0, kind: input, shape index: {}]
  %s1 = inlined_call_operand.vmem [shape: f32[32,4], index: 1, kind: output, shape index: {}]
  // Predicated region
  $region2: #{tile.13} parent=0 // pred_check
    _
  $region3: #{tile.13} parent=0 // pred_check_branch
    %3 = sbr.rel (0) target = $region5
  $region4: #{tile.13} parent=0 // pred_region
    _
  $region5: #{tile.13} parent=0 // pred_fallthru
    _
  %v4 = vld [vmem:[%s0] ss:$0 sm:$0xff]
  %5 = vst [vmem:[%s1] sm:$0xff] %v4
  %s6 = scalar_lea.vmem %s1, 8
  %7 = vst [vmem:[%s6] sm:$0xff] %v4
  %s8 = scalar_lea.vmem %s1, 16
  %9 = vst [vmem:[%s8] sm:$0xff] %v4
  %s10 = scalar_lea.vmem %s1, 24
  %11 = vst [vmem:[%s10] sm:$0xff] %v4

// kernel: tile.14
$region0: #{tile.14}
  %s0 = inlined_call_operand.vmem [shape: f32[32,4], index: 0, kind: input, shape index: {}]
  %s1 = inlined_call_operand.vmem [shape: f32[1,128], index: 1, kind: output, shape index: {}]
  $region1: #{tile.14} parent=0
    #allocation0 [shape = 'u8[4096]{0}', space=vmem, size = 0x1000, scoped, tag = 'scoped mem for output reshape']
    %v2 = vld [vmem:[%s0] sm:$0x1]
    %vm3 = vcmask 31744
    %4 = vst.msk [vmem:[#allocation0] sm:$0x1] %vm3, %v2
    %s5 = scalar_lea.vmem %s0, 31
    %v6 = vld [vmem:[%s5] sm:$0x1]
    %7 = vrot.lane.b32.xlu0 %v6, 124
    %v8 = vpop.permute.xlu0 %7
    %vm9 = vcmask 1048544
    %10 = vst.msk [vmem:[#allocation0] sm:$0x1] %vm9, %v8
    %s11 = scalar_lea.vmem %s0, 30
    %v12 = vld [vmem:[%s11] sm:$0x1]
    %13 = vrot.lane.b32.xlu0 %v12, 120
    %v14 = vpop.permute.xlu0 %13
    %vm15 = vcmask 1015744
    %16 = vst.msk [vmem:[#allocation0] sm:$0x1] %vm15, %v14
    %s17 = scalar_lea.vmem %s0, 29
    %v18 = vld [vmem:[%s17] sm:$0x1]
    %19 = vrot.lane.b32.xlu0 %v18, 116
    %v20 = vpop.permute.xlu0 %19
    %vm21 = vcmask 982944
    %22 = vst.msk [vmem:[#allocation0] sm:$0x1] %vm21, %v20
    %s23 = scalar_lea.vmem %s0, 28
    %v24 = vld [vmem:[%s23] sm:$0x1]
    %25 = vrot.lane.b32.xlu0 %v24, 112
    %v26 = vpop.permute.xlu0 %25
    %vm27 = vcmask 950144
    %28 = vst.msk [vmem:[#allocation0] sm:$0x1] %vm27, %v26
    %s29 = scalar_lea.vmem %s0, 27
    %v30 = vld [vmem:[%s29] sm:$0x1]
    %31 = vrot.lane.b32.xlu0 %v30, 108
    %v32 = vpop.permute.xlu0 %31
    %vm33 = vcmask 917344
    %34 = vst.msk [vmem:[#allocation0] sm:$0x1] %vm33, %v32
    %s35 = scalar_lea.vmem %s0, 26
    %v36 = vld [vmem:[%s35] sm:$0x1]
    %37 = vrot.lane.b32.xlu0 %v36, 104
    %v38 = vpop.permute.xlu0 %37
    %vm39 = vcmask 884544
    %40 = vst.msk [vmem:[#allocation0] sm:$0x1] %vm39, %v38
    %s41 = scalar_lea.vmem %s0, 25
    %v42 = vld [vmem:[%s41] sm:$0x1]
    %43 = vrot.lane.b32.xlu0 %v42, 100
    %v44 = vpop.permute.xlu0 %43
    %vm45 = vcmask 851744
    %46 = vst.msk [vmem:[#allocation0] sm:$0x1] %vm45, %v44
    %s47 = scalar_lea.vmem %s0, 24
    %v48 = vld [vmem:[%s47] sm:$0x1]
    %49 = vrot.lane.b32.xlu0 %v48, 96
    %v50 = vpop.permute.xlu0 %49
    %vm51 = vcmask 818944
    %52 = vst.msk [vmem:[#allocation0] sm:$0x1] %vm51, %v50
    %s53 = scalar_lea.vmem %s0, 23
    %v54 = vld [vmem:[%s53] sm:$0x1]
    %55 = vrot.lane.b32.xlu0 %v54, 92
    %v56 = vpop.permute.xlu0 %55
    %vm57 = vcmask 786144
    %58 = vst.msk [vmem:[#allocation0] sm:$0x1] %vm57, %v56
    %s59 = scalar_lea.vmem %s0, 22
    %v60 = vld [vmem:[%s59] sm:$0x1]
    %61 = vrot.lane.b32.xlu0 %v60, 88
    %v62 = vpop.permute.xlu0 %61
    %vm63 = vcmask 753344
    %64 = vst.msk [vmem:[#allocation0] sm:$0x1] %vm63, %v62
    %s65 = scalar_lea.vmem %s0, 21
    %v66 = vld [vmem:[%s65] sm:$0x1]
    %67 = vrot.lane.b32.xlu0 %v66, 84
    %v68 = vpop.permute.xlu0 %67
    %vm69 = vcmask 720544
    %70 = vst.msk [vmem:[#allocation0] sm:$0x1] %vm69, %v68
    %s71 = scalar_lea.vmem %s0, 20
    %v72 = vld [vmem:[%s71] sm:$0x1]
    %73 = vrot.lane.b32.xlu0 %v72, 80
    %v74 = vpop.permute.xlu0 %73
    %vm75 = vcmask 687744
    %76 = vst.msk [vmem:[#allocation0] sm:$0x1] %vm75, %v74
    %s77 = scalar_lea.vmem %s0, 19
    %v78 = vld [vmem:[%s77] sm:$0x1]
    %79 = vrot.lane.b32.xlu0 %v78, 76
    %v80 = vpop.permute.xlu0 %79
    %vm81 = vcmask 654944
    %82 = vst.msk [vmem:[#allocation0] sm:$0x1] %vm81, %v80
    %s83 = scalar_lea.vmem %s0, 18
    %v84 = vld [vmem:[%s83] sm:$0x1]
    %85 = vrot.lane.b32.xlu0 %v84, 72
    %v86 = vpop.permute.xlu0 %85
    %vm87 = vcmask 622144
    %88 = vst.msk [vmem:[#allocation0] sm:$0x1] %vm87, %v86
    %s89 = scalar_lea.vmem %s0, 17
    %v90 = vld [vmem:[%s89] sm:$0x1]
    %91 = vrot.lane.b32.xlu0 %v90, 68
    %v92 = vpop.permute.xlu0 %91
    %vm93 = vcmask 589344
    %94 = vst.msk [vmem:[#allocation0] sm:$0x1] %vm93, %v92
    %s95 = scalar_lea.vmem %s0, 16
    %v96 = vld [vmem:[%s95] sm:$0x1]
    %97 = vrot.lane.b32.xlu0 %v96, 64
    %v98 = vpop.permute.xlu0 %97
    %vm99 = vcmask 556544
    %100 = vst.msk [vmem:[#allocation0] sm:$0x1] %vm99, %v98
    %s101 = scalar_lea.vmem %s0, 15
    %v102 = vld [vmem:[%s101] sm:$0x1]
    %103 = vrot.lane.b32.xlu0 %v102, 60
    %v104 = vpop.permute.xlu0 %103
    %vm105 = vcmask 523744
    %106 = vst.msk [vmem:[#allocation0] sm:$0x1] %vm105, %v104
    %s107 = scalar_lea.vmem %s0, 14
    %v108 = vld [vmem:[%s107] sm:$0x1]
    %109 = vrot.lane.b32.xlu0 %v108, 56
    %v110 = vpop.permute.xlu0 %109
    %vm111 = vcmask 490944
    %112 = vst.msk [vmem:[#allocation0] sm:$0x1] %vm111, %v110
    %s113 = scalar_lea.vmem %s0, 13
    %v114 = vld [vmem:[%s113] sm:$0x1]
    %115 = vrot.lane.b32.xlu0 %v114, 52
    %v116 = vpop.permute.xlu0 %115
    %vm117 = vcmask 458144
    %118 = vst.msk [vmem:[#allocation0] sm:$0x1] %vm117, %v116
    %s119 = scalar_lea.vmem %s0, 12
    %v120 = vld [vmem:[%s119] sm:$0x1]
    %121 = vrot.lane.b32.xlu0 %v120, 48
    %v122 = vpop.permute.xlu0 %121
    %vm123 = vcmask 425344
    %124 = vst.msk [vmem:[#allocation0] sm:$0x1] %vm123, %v122
    %s125 = scalar_lea.vmem %s0, 11
    %v126 = vld [vmem:[%s125] sm:$0x1]
    %127 = vrot.lane.b32.xlu0 %v126, 44
    %v128 = vpop.permute.xlu0 %127
    %vm129 = vcmask 392544
    %130 = vst.msk [vmem:[#allocation0] sm:$0x1] %vm129, %v128
    %s131 = scalar_lea.vmem %s0, 10
    %v132 = vld [vmem:[%s131] sm:$0x1]
    %133 = vrot.lane.b32.xlu0 %v132, 40
    %v134 = vpop.permute.xlu0 %133
    %vm135 = vcmask 359744
    %136 = vst.msk [vmem:[#allocation0] sm:$0x1] %vm135, %v134
    %s137 = scalar_lea.vmem %s0, 9
    %v138 = vld [vmem:[%s137] sm:$0x1]
    %139 = vrot.lane.b32.xlu0 %v138, 36
    %v140 = vpop.permute.xlu0 %139
    %vm141 = vcmask 326944
    %142 = vst.msk [vmem:[#allocation0] sm:$0x1] %vm141, %v140
    %s143 = scalar_lea.vmem %s0, 8
    %v144 = vld [vmem:[%s143] sm:$0x1]
    %145 = vrot.lane.b32.xlu0 %v144, 32
    %v146 = vpop.permute.xlu0 %145
    %vm147 = vcmask 294144
    %148 = vst.msk [vmem:[#allocation0] sm:$0x1] %vm147, %v146
    %s149 = scalar_lea.vmem %s0, 7
    %v150 = vld [vmem:[%s149] sm:$0x1]
    %151 = vrot.lane.b32.xlu0 %v150, 28
    %v152 = vpop.permute.xlu0 %151
    %vm153 = vcmask 261344
    %154 = vst.msk [vmem:[#allocation0] sm:$0x1] %vm153, %v152
    %s155 = scalar_lea.vmem %s0, 6
    %v156 = vld [vmem:[%s155] sm:$0x1]
    %157 = vrot.lane.b32.xlu0 %v156, 24
    %v158 = vpop.permute.xlu0 %157
    %vm159 = vcmask 228544
    %160 = vst.msk [vmem:[#allocation0] sm:$0x1] %vm159, %v158
    %s161 = scalar_lea.vmem %s0, 5
    %v162 = vld [vmem:[%s161] sm:$0x1]
    %163 = vrot.lane.b32.xlu0 %v162, 20
    %v164 = vpop.permute.xlu0 %163
    %vm165 = vcmask 195744
    %166 = vst.msk [vmem:[#allocation0] sm:$0x1] %vm165, %v164
    %s167 = scalar_lea.vmem %s0, 4
    %v168 = vld [vmem:[%s167] sm:$0x1]
    %169 = vrot.lane.b32.xlu0 %v168, 16
    %v170 = vpop.permute.xlu0 %169
    %vm171 = vcmask 162944
    %172 = vst.msk [vmem:[#allocation0] sm:$0x1] %vm171, %v170
    %s173 = scalar_lea.vmem %s0, 3
    %v174 = vld [vmem:[%s173] sm:$0x1]
    %175 = vrot.lane.b32.xlu0 %v174, 12
    %v176 = vpop.permute.xlu0 %175
    %vm177 = vcmask 130144
    %178 = vst.msk [vmem:[#allocation0] sm:$0x1] %vm177, %v176
    %s179 = scalar_lea.vmem %s0, 2
    %v180 = vld [vmem:[%s179] sm:$0x1]
    %181 = vrot.lane.b32.xlu0 %v180, 8
    %v182 = vpop.permute.xlu0 %181
    %vm183 = vcmask 97344
    %184 = vst.msk [vmem:[#allocation0] sm:$0x1] %vm183, %v182
    %s185 = scalar_lea.vmem %s0, 1
    %v186 = vld [vmem:[%s185] sm:$0x1]
    %187 = vrot.lane.b32.xlu0 %v186, 4
    %v188 = vpop.permute.xlu0 %187
    %vm189 = vcmask 64544
    %190 = vst.msk [vmem:[#allocation0] sm:$0x1] %vm189, %v188
    %s192 = sshll.u32 1, 1
    %s193 = ssub.s32 %s192, 1
    %v195 = vld [vmem:[#allocation0] sm:%s193]
    %s196 = sshll.u32 1, 1
    %s197 = ssub.s32 %s196, 1
    %198 = vst [vmem:[%s1] sm:%s197] %v195

// kernel: downsample_block.5
$region0: #{downsample_block.5}
  #allocation0 [shape = 'u32[]', space=smem, size = 0x4, offset = 0x4, fixed_abs, tag = 'smem constant byte address 0x4 - core index']
  #allocation1 [shape = 'u32[144,128]{1,0:T(1,128)}', space=vmem, size = 0x12000, scoped, tag = 'internal scratch']
  %s0 = inlined_call_operand.vmem [shape: f32[16,128], index: 0, kind: input, shape index: {}]
  %s1 = inlined_call_operand.vmem [shape: f32[1,128], index: 1, kind: output, shape index: {0}]
  %s2 = inlined_call_operand.vmem [shape: f32[1,128], index: 2, kind: output, shape index: {1}]
  %3 = xla_tuple %s1, %s2
  %s4 = sld [smem:[#allocation0]]
  $region26: #{downsample_block.5} parent=0
    _
  %s6 = ssub.s32 1, %s4
  %s7 = scalar_select 0, %s6, %s4
  // Predicated region
  $region2: #{downsample_block.5} parent=0 // pred_check
    _
  $region3: #{downsample_block.5} parent=0 // pred_check_branch
    %9 = sbr.rel (0) target = $region5
  $region4: #{downsample_block.5} parent=0 // pred_region
    _
  $region5: #{downsample_block.5} parent=0 // pred_fallthru
    _
  %p10 = scmp.eq.s32.totalorder 0, 0
  // Predicated region
  $region6: #{downsample_block.5} parent=0 // pred_check
    %p11 = pneg %p10
  $region7: #{downsample_block.5} parent=0 // pred_check_branch
    %13 = sbr.rel (%p11) target = $region9
  $region8: #{downsample_block.5} parent=0 // pred_region
    %14 = vst [vmem:[%s1] sm:$0x1] 0.0
    %15 = vst [vmem:[%s2] sm:$0x1] 0.0
  $region9: #{downsample_block.5} parent=0 // pred_fallthru
    _
  %v16 = vld [vmem:[%s0] sm:$0xff]
  %v17 = vld [vmem:[%s0 + $0x8] sm:$0xff]
  %v18 = vld [vmem:[%s1] sm:$0x1]
  %v19 = vadd.f32 %v16, %v17
  %v20 = vrot.slane %v19, 4
  %v21 = vadd.f32 %v19, %v20
  %v22 = vrot.slane %v21, 2
  %v23 = vadd.f32 %v21, %v22
  %v24 = vrot.slane %v23, 1
  %v25 = vadd.f32 %v23, %v24
  %v26 = vadd.f32 %v18, %v25
  %27 = vst [vmem:[%s1] sm:$0x1] %v26
  %v28 = vld [vmem:[%s2] sm:$0x1]
  %v29 = vmul.f32 %v16, %v16
  %v30 = vmul.f32 %v17, %v17
  %v31 = vadd.f32 %v29, %v30
  %v32 = vrot.slane %v31, 4
  %v33 = vadd.f32 %v31, %v32
  %v34 = vrot.slane %v33, 2
  %v35 = vadd.f32 %v33, %v34
  %v36 = vrot.slane %v35, 1
  %v37 = vadd.f32 %v35, %v36
  %v38 = vadd.f32 %v28, %v37
  %39 = vst [vmem:[%s2] sm:$0x1] %v38
  // Predicated region
  $region10: #{downsample_block.5} parent=0 // pred_check
    _
  $region11: #{downsample_block.5} parent=0 // pred_check_branch
    %41 = sbr.rel (0) target = $region13
  $region12: #{downsample_block.5} parent=0 // pred_region
    _
  $region13: #{downsample_block.5} parent=0 // pred_fallthru
    _
  // Predicated region
  $region14: #{downsample_block.5} parent=0 // pred_check
    _
  $region15: #{downsample_block.5} parent=0 // pred_check_branch
    %43 = sbr.rel (0) target = $region17
  $region16: #{downsample_block.5} parent=0 // pred_region
    _
  $region17: #{downsample_block.5} parent=0 // pred_fallthru
    _
  // Predicated region
  $region18: #{downsample_block.5} parent=0 // pred_check
    _
  $region19: #{downsample_block.5} parent=0 // pred_check_branch
    %45 = sbr.rel (0) target = $region21
  $region20: #{downsample_block.5} parent=0 // pred_region
    _
  $region21: #{downsample_block.5} parent=0 // pred_fallthru
    _
  // Predicated region
  $region22: #{downsample_block.5} parent=0 // pred_check
    _
  $region23: #{downsample_block.5} parent=0 // pred_check_branch
    %47 = sbr.rel (0) target = $region25
  $region24: #{downsample_block.5} parent=0 // pred_region
    _
  $region25: #{downsample_block.5} parent=0 // pred_fallthru
    _

// kernel: downsample_block.6
$region0: #{downsample_block.6}
  #allocation0 [shape = 'u32[]', space=smem, size = 0x4, offset = 0x4, fixed_abs, tag = 'smem constant byte address 0x4 - core index']
  #allocation1 [shape = 'u32[144,128]{1,0:T(1,128)}', space=vmem, size = 0x12000, scoped, tag = 'internal scratch']
  %s0 = inlined_call_operand.vmem [shape: f32[16,128], index: 0, kind: input, shape index: {}]
  %s1 = inlined_call_operand.vmem [shape: f32[1,128], index: 1, kind: input, shape index: {}]
  %s2 = inlined_call_operand.vmem [shape: f32[1,128], index: 2, kind: input, shape index: {}]
  %s3 = inlined_call_operand.vmem [shape: bf16[16,128], index: 3, kind: output, shape index: {}]
  %s4 = sld [smem:[#allocation0]]
  $region22: #{downsample_block.6} parent=0
    _
  %s6 = ssub.s32 1, %s4
  %s7 = scalar_select 0, %s6, %s4
  // Predicated region
  $region2: #{downsample_block.6} parent=0 // pred_check
    _
  $region3: #{downsample_block.6} parent=0 // pred_check_branch
    %9 = sbr.rel (0) target = $region5
  $region4: #{downsample_block.6} parent=0 // pred_region
    _
  $region5: #{downsample_block.6} parent=0 // pred_fallthru
    _
  // Predicated region
  $region6: #{downsample_block.6} parent=0 // pred_check
    _
  $region7: #{downsample_block.6} parent=0 // pred_check_branch
    %11 = sbr.rel (0) target = $region9
  $region8: #{downsample_block.6} parent=0 // pred_region
    _
  $region9: #{downsample_block.6} parent=0 // pred_fallthru
    _
  // Predicated region
  $region10: #{downsample_block.6} parent=0 // pred_check
    _
  $region11: #{downsample_block.6} parent=0 // pred_check_branch
    %13 = sbr.rel (0) target = $region13
  $region12: #{downsample_block.6} parent=0 // pred_region
    _
  $region13: #{downsample_block.6} parent=0 // pred_fallthru
    _
  %v14 = vld [vmem:[%s0] sm:$0xff]
  %v15 = vld [vmem:[%s0 + $0x8] sm:$0xff]
  %v16 = vld [vmem:[%s1] sm:$0x1]
  %v18 = vlaneseq
  %v19 = vshrl.u32 %v18, 7
  %v20 = vsub.s32 0, %v19
  %v21 = vrot.slane %v16, %v20
  %v23 = vsub.f32 %v14, %v21
  %v24 = vsub.f32 %v15, %v21
  %v25 = vld [vmem:[%s2] sm:$0x1]
  %v27 = vlaneseq
  %v28 = vshrl.u32 %v27, 7
  %v29 = vsub.s32 0, %v28
  %v30 = vrot.slane %v25, %v29
  %v32 = vmul.f32 %v23, %v30
  %v33 = vmul.f32 %v24, %v30
  %v34 = vmax.f32 %v32, 0.0
  %v35 = vmax.f32 %v33, 0.0
  %v36 = vmin.f32 %v34, 6.0
  %v37 = vmin.f32 %v35, 6.0
  %v38 = vround.ne.pseudo %v36
  %v39 = vround.ne.pseudo %v37
  %v40 = vpack.c.bf16 %v39, %v38
  %v42 = vunpack.c.l.b16 %v40
  %v43 = vunpack.c.h.b16 %v40
  %v44 = vpack.c.b16 %v42, %v42
  %v45 = vpack.c.b16 %v43, %v43
  %48 = vst [vmem:[%s3] sm:$0xf] %v44
  %49 = vst [vmem:[%s3 + $0x4] sm:$0xf] %v45
  // Predicated region
  $region14: #{downsample_block.6} parent=0 // pred_check
    _
  $region15: #{downsample_block.6} parent=0 // pred_check_branch
    %51 = sbr.rel (0) target = $region17
  $region16: #{downsample_block.6} parent=0 // pred_region
    _
  $region17: #{downsample_block.6} parent=0 // pred_fallthru
    _
  // Predicated region
  $region18: #{downsample_block.6} parent=0 // pred_check
    _
  $region19: #{downsample_block.6} parent=0 // pred_check_branch
    %53 = sbr.rel (0) target = $region21
  $region20: #{downsample_block.6} parent=0 // pred_region
    _
  $region21: #{downsample_block.6} parent=0 // pred_fallthru
    _

// kernel: downsample_block.7
$region0: #{downsample_block.7}
  #allocation0 [shape = 'u32[]', space=smem, size = 0x4, offset = 0x4, fixed_abs, tag = 'smem constant byte address 0x4 - core index']
  #allocation1 [shape = 'u32[144,128]{1,0:T(1,128)}', space=vmem, size = 0x12000, scoped, tag = 'internal scratch']
  #allocation2 [shape = 'f32[128,128]{1,0:T(8,128)}', space=vmem, size = 0x10000, scoped, tag = 'scratch operand']
  %s0 = inlined_call_operand.vmem [shape: bf16[128,128], index: 0, kind: input, shape index: {}]
  %s1 = inlined_call_operand.vmem [shape: bf16[128,128], index: 1, kind: input, shape index: {}]
  %s2 = inlined_call_operand.vmem [shape: f32[128,128], index: 2, kind: output, shape index: {0}]
  %s3 = inlined_call_operand.vmem [shape: f32[1,128], index: 3, kind: output, shape index: {1}]
  %s4 = inlined_call_operand.vmem [shape: f32[1,128], index: 4, kind: output, shape index: {2}]
  %5 = xla_tuple %s2, %s3, %s4
  %s6 = sld [smem:[#allocation0]]
  $region50: #{downsample_block.7} parent=0
    _
  %s8 = ssub.s32 1, %s6
  %s9 = scalar_select 0, %s8, %s6
  // Predicated region
  $region2: #{downsample_block.7} parent=0 // pred_check
    _
  $region3: #{downsample_block.7} parent=0 // pred_check_branch
    %11 = sbr.rel (0) target = $region5
  $region4: #{downsample_block.7} parent=0 // pred_region
    _
  $region5: #{downsample_block.7} parent=0 // pred_fallthru
    _
  // Predicated region
  $region6: #{downsample_block.7} parent=0 // pred_check
    _
  $region7: #{downsample_block.7} parent=0 // pred_check_branch
    %13 = sbr.rel (0) target = $region9
  $region8: #{downsample_block.7} parent=0 // pred_region
    _
  $region9: #{downsample_block.7} parent=0 // pred_fallthru
    _
  %p15 = scmp.eq.s32.totalorder 0, 0
  // Predicated region
  $region10: #{downsample_block.7} parent=0 // pred_check
    %p16 = pneg %p15
  $region11: #{downsample_block.7} parent=0 // pred_check_branch
    %18 = sbr.rel (%p16) target = $region13
  $region12: #{downsample_block.7} parent=0 // pred_region
    %19 = vst [vmem:[#allocation2] sm:$0xff] 0.0
    %20 = vst [vmem:[#allocation2 + $0x8] sm:$0xff] 0.0
    %21 = vst [vmem:[#allocation2 + $0x10] sm:$0xff] 0.0
    %22 = vst [vmem:[#allocation2 + $0x18] sm:$0xff] 0.0
    %23 = vst [vmem:[#allocation2 + $0x20] sm:$0xff] 0.0
    %24 = vst [vmem:[#allocation2 + $0x28] sm:$0xff] 0.0
    %25 = vst [vmem:[#allocation2 + $0x30] sm:$0xff] 0.0
    %26 = vst [vmem:[#allocation2 + $0x38] sm:$0xff] 0.0
    %27 = vst [vmem:[#allocation2 + $0x40] sm:$0xff] 0.0
    %28 = vst [vmem:[#allocation2 + $0x48] sm:$0xff] 0.0
    %29 = vst [vmem:[#allocation2 + $0x50] sm:$0xff] 0.0
    %30 = vst [vmem:[#allocation2 + $0x58] sm:$0xff] 0.0
    %31 = vst [vmem:[#allocation2 + $0x60] sm:$0xff] 0.0
    %32 = vst [vmem:[#allocation2 + $0x68] sm:$0xff] 0.0
    %33 = vst [vmem:[#allocation2 + $0x70] sm:$0xff] 0.0
    %34 = vst [vmem:[#allocation2 + $0x78] sm:$0xff] 0.0
  $region13: #{downsample_block.7} parent=0 // pred_fallthru
    _
  %v35 = vld [vmem:[#allocation2] sm:$0xff]
  %v36 = vld [vmem:[#allocation2 + $0x8] sm:$0xff]
  %v37 = vld [vmem:[#allocation2 + $0x10] sm:$0xff]
  %v38 = vld [vmem:[#allocation2 + $0x18] sm:$0xff]
  %v39 = vld [vmem:[#allocation2 + $0x20] sm:$0xff]
  %v40 = vld [vmem:[#allocation2 + $0x28] sm:$0xff]
  %v41 = vld [vmem:[#allocation2 + $0x30] sm:$0xff]
  %v42 = vld [vmem:[#allocation2 + $0x38] sm:$0xff]
  %v43 = vld [vmem:[#allocation2 + $0x40] sm:$0xff]
  %v44 = vld [vmem:[#allocation2 + $0x48] sm:$0xff]
  %v45 = vld [vmem:[#allocation2 + $0x50] sm:$0xff]
  %v46 = vld [vmem:[#allocation2 + $0x58] sm:$0xff]
  %v47 = vld [vmem:[#allocation2 + $0x60] sm:$0xff]
  %v48 = vld [vmem:[#allocation2 + $0x68] sm:$0xff]
  %v49 = vld [vmem:[#allocation2 + $0x70] sm:$0xff]
  %v50 = vld [vmem:[#allocation2 + $0x78] sm:$0xff]
  %v51 = vld [vmem:[%s0] sm:$0xf]
  %v52 = vld [vmem:[%s0 + $0x4] sm:$0xf]
  %v53 = vld [vmem:[%s0 + $0x8] sm:$0xf]
  %v54 = vld [vmem:[%s0 + $0xc] sm:$0xf]
  %v55 = vld [vmem:[%s0 + $0x10] sm:$0xf]
  %v56 = vld [vmem:[%s0 + $0x14] sm:$0xf]
  %v57 = vld [vmem:[%s0 + $0x18] sm:$0xf]
  %v58 = vld [vmem:[%s0 + $0x1c] sm:$0xf]
  %v59 = vld [vmem:[%s0 + $0x20] sm:$0xf]
  %v60 = vld [vmem:[%s0 + $0x24] sm:$0xf]
  %v61 = vld [vmem:[%s0 + $0x28] sm:$0xf]
  %v62 = vld [vmem:[%s0 + $0x2c] sm:$0xf]
  %v63 = vld [vmem:[%s0 + $0x30] sm:$0xf]
  %v64 = vld [vmem:[%s0 + $0x34] sm:$0xf]
  %v65 = vld [vmem:[%s0 + $0x38] sm:$0xf]
  %v66 = vld [vmem:[%s0 + $0x3c] sm:$0xf]
  %v67 = vld [vmem:[%s1] sm:$0xf]
  %v68 = vld [vmem:[%s1 + $0x4] sm:$0xf]
  %v69 = vld [vmem:[%s1 + $0x8] sm:$0xf]
  %v70 = vld [vmem:[%s1 + $0xc] sm:$0xf]
  %v71 = vld [vmem:[%s1 + $0x10] sm:$0xf]
  %v72 = vld [vmem:[%s1 + $0x14] sm:$0xf]
  %v73 = vld [vmem:[%s1 + $0x18] sm:$0xf]
  %v74 = vld [vmem:[%s1 + $0x1c] sm:$0xf]
  %v75 = vld [vmem:[%s1 + $0x20] sm:$0xf]
  %v76 = vld [vmem:[%s1 + $0x24] sm:$0xf]
  %v77 = vld [vmem:[%s1 + $0x28] sm:$0xf]
  %v78 = vld [vmem:[%s1 + $0x2c] sm:$0xf]
  %v79 = vld [vmem:[%s1 + $0x30] sm:$0xf]
  %v80 = vld [vmem:[%s1 + $0x34] sm:$0xf]
  %v81 = vld [vmem:[%s1 + $0x38] sm:$0xf]
  %v82 = vld [vmem:[%s1 + $0x3c] sm:$0xf]
  %v99 = vunpack.c.l.b16 %v51
  %v100 = vunpack.c.l.b16 %v52
  %v101 = vunpack.c.l.b16 %v53
  %v102 = vunpack.c.l.b16 %v54
  %v103 = vunpack.c.l.b16 %v55
  %v104 = vunpack.c.l.b16 %v56
  %v105 = vunpack.c.l.b16 %v57
  %v106 = vunpack.c.l.b16 %v58
  %v107 = vunpack.c.l.b16 %v59
  %v108 = vunpack.c.l.b16 %v60
  %v109 = vunpack.c.l.b16 %v61
  %v110 = vunpack.c.l.b16 %v62
  %v111 = vunpack.c.l.b16 %v63
  %v112 = vunpack.c.l.b16 %v64
  %v113 = vunpack.c.l.b16 %v65
  %v114 = vunpack.c.l.b16 %v66
  %v115 = vpack.c.b16 %v100, %v99
  %v116 = vpack.c.b16 %v102, %v101
  %v117 = vpack.c.b16 %v104, %v103
  %v118 = vpack.c.b16 %v106, %v105
  %v119 = vpack.c.b16 %v108, %v107
  %v120 = vpack.c.b16 %v110, %v109
  %v121 = vpack.c.b16 %v112, %v111
  %v122 = vpack.c.b16 %v114, %v113
  %v147 = vunpack.c.l.b16 %v67
  %v148 = vunpack.c.l.b16 %v68
  %v149 = vunpack.c.l.b16 %v69
  %v150 = vunpack.c.l.b16 %v70
  %v151 = vunpack.c.l.b16 %v71
  %v152 = vunpack.c.l.b16 %v72
  %v153 = vunpack.c.l.b16 %v73
  %v154 = vunpack.c.l.b16 %v74
  %v155 = vunpack.c.l.b16 %v75
  %v156 = vunpack.c.l.b16 %v76
  %v157 = vunpack.c.l.b16 %v77
  %v158 = vunpack.c.l.b16 %v78
  %v159 = vunpack.c.l.b16 %v79
  %v160 = vunpack.c.l.b16 %v80
  %v161 = vunpack.c.l.b16 %v81
  %v162 = vunpack.c.l.b16 %v82
  %v163 = vpack.c.b16 %v148, %v147
  %v164 = vpack.c.b16 %v150, %v149
  %v165 = vpack.c.b16 %v152, %v151
  %v166 = vpack.c.b16 %v154, %v153
  %v167 = vpack.c.b16 %v156, %v155
  %v168 = vpack.c.b16 %v158, %v157
  %v169 = vpack.c.b16 %v160, %v159
  %v170 = vpack.c.b16 %v162, %v161
  %179 = vmatprep.subr.bf16.mxu0 0
  %180 = vmatpush1.bf16.msra.mxu0 %v170
  %181 = vmatprep.subr.bf16.mxu0 0
  %182 = vmatpush1.bf16.msra.mxu0 %v169
  %183 = vmatprep.subr.bf16.mxu0 0
  %184 = vmatpush1.bf16.msra.mxu0 %v168
  %185 = vmatprep.subr.bf16.mxu0 0
  %186 = vmatpush1.bf16.msra.mxu0 %v167
  %187 = vmatprep.subr.bf16.mxu0 0
  %188 = vmatpush1.bf16.msra.mxu0 %v166
  %189 = vmatprep.subr.bf16.mxu0 0
  %190 = vmatpush1.bf16.msra.mxu0 %v165
  %191 = vmatprep.subr.bf16.mxu0 0
  %192 = vmatpush1.bf16.msra.mxu0 %v164
  %193 = vmatprep.subr.bf16.mxu0 0
  %194 = vmatpush1.bf16.msra.mxu0 %v163
  %195 = vmatprep.subr.bf16.mxu0 0
  %196 = vmatpush2.bf16.msra.mxu0 0
  %197 = vmatprep.subr.bf16.mxu0 0
  %198 = vmatpush2.bf16.msra.mxu0 0
  %199 = vmatprep.subr.bf16.mxu0 0
  %200 = vmatpush2.bf16.msra.mxu0 0
  %201 = vmatprep.subr.bf16.mxu0 0
  %202 = vmatpush2.bf16.msra.mxu0 0
  %203 = vmatprep.subr.bf16.mxu0 0
  %204 = vmatpush2.bf16.msra.mxu0 0
  %205 = vmatprep.subr.bf16.mxu0 0
  %206 = vmatpush2.bf16.msra.mxu0 0
  %207 = vmatprep.subr.bf16.mxu0 0
  %208 = vmatpush2.bf16.msra.mxu0 0
  %209 = vmatprep.subr.bf16.mxu0 0
  %210 = vmatpush2.bf16.msra.mxu0 0
  %211 = vmatprep.mubr.bf16.mxu0 0
  %212 = vmatmul.mubr.bf16.gmra.mxu0 %v115
  %v213 = vpop.f32.mrf.mxu0
  %v214 = vadd.f32 0.0, %v213
  %v215 = vpop.f32.mrf.mxu0
  %v216 = vpop.f32.mrf.mxu0
  %v217 = vadd.f32 0.0, %v216
  %v218 = vpop.f32.mrf.mxu0
  %219 = vmatprep.mubr.bf16.mxu0 0
  %220 = vmatmul.mubr.bf16.gmra.mxu0 %v116
  %v221 = vpop.f32.mrf.mxu0
  %v222 = vadd.f32 0.0, %v221
  %v223 = vpop.f32.mrf.mxu0
  %v224 = vpop.f32.mrf.mxu0
  %v225 = vadd.f32 0.0, %v224
  %v226 = vpop.f32.mrf.mxu0
  %227 = vmatprep.mubr.bf16.mxu0 0
  %228 = vmatmul.mubr.bf16.gmra.mxu0 %v117
  %v229 = vpop.f32.mrf.mxu0
  %v230 = vadd.f32 0.0, %v229
  %v231 = vpop.f32.mrf.mxu0
  %v232 = vpop.f32.mrf.mxu0
  %v233 = vadd.f32 0.0, %v232
  %v234 = vpop.f32.mrf.mxu0
  %235 = vmatprep.mubr.bf16.mxu0 0
  %236 = vmatmul.mubr.bf16.gmra.mxu0 %v118
  %v237 = vpop.f32.mrf.mxu0
  %v238 = vadd.f32 0.0, %v237
  %v239 = vpop.f32.mrf.mxu0
  %v240 = vpop.f32.mrf.mxu0
  %v241 = vadd.f32 0.0, %v240
  %v242 = vpop.f32.mrf.mxu0
  %243 = vmatprep.mubr.bf16.mxu0 0
  %244 = vmatmul.mubr.bf16.gmra.mxu0 %v119
  %v245 = vpop.f32.mrf.mxu0
  %v246 = vadd.f32 0.0, %v245
  %v247 = vpop.f32.mrf.mxu0
  %v248 = vpop.f32.mrf.mxu0
  %v249 = vadd.f32 0.0, %v248
  %v250 = vpop.f32.mrf.mxu0
  %251 = vmatprep.mubr.bf16.mxu0 0
  %252 = vmatmul.mubr.bf16.gmra.mxu0 %v120
  %v253 = vpop.f32.mrf.mxu0
  %v254 = vadd.f32 0.0, %v253
  %v255 = vpop.f32.mrf.mxu0
  %v256 = vpop.f32.mrf.mxu0
  %v257 = vadd.f32 0.0, %v256
  %v258 = vpop.f32.mrf.mxu0
  %259 = vmatprep.mubr.bf16.mxu0 0
  %260 = vmatmul.mubr.bf16.gmra.mxu0 %v121
  %v261 = vpop.f32.mrf.mxu0
  %v262 = vadd.f32 0.0, %v261
  %v263 = vpop.f32.mrf.mxu0
  %v264 = vpop.f32.mrf.mxu0
  %v265 = vadd.f32 0.0, %v264
  %v266 = vpop.f32.mrf.mxu0
  %267 = vmatprep.mubr.bf16.mxu0 0
  %268 = vmatmul.mubr.bf16.gmra.mxu0 %v122
  %v269 = vpop.f32.mrf.mxu0
  %v270 = vadd.f32 0.0, %v269
  %v271 = vpop.f32.mrf.mxu0
  %v272 = vpop.f32.mrf.mxu0
  %v273 = vadd.f32 0.0, %v272
  %v274 = vpop.f32.mrf.mxu0
  %275 = vdwg.mxu0
  %v276 = vadd.f32 %v35, %v214
  %v277 = vadd.f32 %v36, %v217
  %v278 = vadd.f32 %v37, %v222
  %v279 = vadd.f32 %v38, %v225
  %v280 = vadd.f32 %v39, %v230
  %v281 = vadd.f32 %v40, %v233
  %v282 = vadd.f32 %v41, %v238
  %v283 = vadd.f32 %v42, %v241
  %v284 = vadd.f32 %v43, %v246
  %v285 = vadd.f32 %v44, %v249
  %v286 = vadd.f32 %v45, %v254
  %v287 = vadd.f32 %v46, %v257
  %v288 = vadd.f32 %v47, %v262
  %v289 = vadd.f32 %v48, %v265
  %v290 = vadd.f32 %v49, %v270
  %v291 = vadd.f32 %v50, %v273
  %292 = vst [vmem:[#allocation2] sm:$0xff] %v276
  %293 = vst [vmem:[#allocation2 + $0x8] sm:$0xff] %v277
  %294 = vst [vmem:[#allocation2 + $0x10] sm:$0xff] %v278
  %295 = vst [vmem:[#allocation2 + $0x18] sm:$0xff] %v279
  %296 = vst [vmem:[#allocation2 + $0x20] sm:$0xff] %v280
  %297 = vst [vmem:[#allocation2 + $0x28] sm:$0xff] %v281
  %298 = vst [vmem:[#allocation2 + $0x30] sm:$0xff] %v282
  %299 = vst [vmem:[#allocation2 + $0x38] sm:$0xff] %v283
  %300 = vst [vmem:[#allocation2 + $0x40] sm:$0xff] %v284
  %301 = vst [vmem:[#allocation2 + $0x48] sm:$0xff] %v285
  %302 = vst [vmem:[#allocation2 + $0x50] sm:$0xff] %v286
  %303 = vst [vmem:[#allocation2 + $0x58] sm:$0xff] %v287
  %304 = vst [vmem:[#allocation2 + $0x60] sm:$0xff] %v288
  %305 = vst [vmem:[#allocation2 + $0x68] sm:$0xff] %v289
  %306 = vst [vmem:[#allocation2 + $0x70] sm:$0xff] %v290
  %307 = vst [vmem:[#allocation2 + $0x78] sm:$0xff] %v291
  // Predicated region
  $region14: #{downsample_block.7} parent=0 // pred_check
    %p308 = pneg %p15
  $region15: #{downsample_block.7} parent=0 // pred_check_branch
    %310 = sbr.rel (%p308) target = $region17
  $region16: #{downsample_block.7} parent=0 // pred_region
    %v311 = vld [vmem:[#allocation2] sm:$0xff]
    %v312 = vld [vmem:[#allocation2 + $0x8] sm:$0xff]
    %v313 = vld [vmem:[#allocation2 + $0x10] sm:$0xff]
    %v314 = vld [vmem:[#allocation2 + $0x18] sm:$0xff]
    %v315 = vld [vmem:[#allocation2 + $0x20] sm:$0xff]
    %v316 = vld [vmem:[#allocation2 + $0x28] sm:$0xff]
    %v317 = vld [vmem:[#allocation2 + $0x30] sm:$0xff]
    %v318 = vld [vmem:[#allocation2 + $0x38] sm:$0xff]
    %v319 = vld [vmem:[#allocation2 + $0x40] sm:$0xff]
    %v320 = vld [vmem:[#allocation2 + $0x48] sm:$0xff]
    %v321 = vld [vmem:[#allocation2 + $0x50] sm:$0xff]
    %v322 = vld [vmem:[#allocation2 + $0x58] sm:$0xff]
    %v323 = vld [vmem:[#allocation2 + $0x60] sm:$0xff]
    %v324 = vld [vmem:[#allocation2 + $0x68] sm:$0xff]
    %v325 = vld [vmem:[#allocation2 + $0x70] sm:$0xff]
    %v326 = vld [vmem:[#allocation2 + $0x78] sm:$0xff]
    %327 = vst [vmem:[%s2] sm:$0xff] %v311
    %328 = vst [vmem:[%s2 + $0x8] sm:$0xff] %v312
    %329 = vst [vmem:[%s2 + $0x10] sm:$0xff] %v313
    %330 = vst [vmem:[%s2 + $0x18] sm:$0xff] %v314
    %331 = vst [vmem:[%s2 + $0x20] sm:$0xff] %v315
    %332 = vst [vmem:[%s2 + $0x28] sm:$0xff] %v316
    %333 = vst [vmem:[%s2 + $0x30] sm:$0xff] %v317
    %334 = vst [vmem:[%s2 + $0x38] sm:$0xff] %v318
    %335 = vst [vmem:[%s2 + $0x40] sm:$0xff] %v319
    %336 = vst [vmem:[%s2 + $0x48] sm:$0xff] %v320
    %337 = vst [vmem:[%s2 + $0x50] sm:$0xff] %v321
    %338 = vst [vmem:[%s2 + $0x58] sm:$0xff] %v322
    %339 = vst [vmem:[%s2 + $0x60] sm:$0xff] %v323
    %340 = vst [vmem:[%s2 + $0x68] sm:$0xff] %v324
    %341 = vst [vmem:[%s2 + $0x70] sm:$0xff] %v325
    %342 = vst [vmem:[%s2 + $0x78] sm:$0xff] %v326
    %v343 = vadd.f32 %v311, %v312
    %v344 = vadd.f32 %v343, %v313
    %v345 = vadd.f32 %v344, %v314
    %v346 = vadd.f32 %v345, %v315
    %v347 = vadd.f32 %v346, %v316
    %v348 = vadd.f32 %v347, %v317
    %v349 = vadd.f32 %v348, %v318
    %v350 = vadd.f32 %v349, %v319
    %v351 = vadd.f32 %v350, %v320
    %v352 = vadd.f32 %v351, %v321
    %v353 = vadd.f32 %v352, %v322
    %v354 = vadd.f32 %v353, %v323
    %v355 = vadd.f32 %v354, %v324
    %v356 = vadd.f32 %v355, %v325
    %v357 = vadd.f32 %v356, %v326
    %v358 = vrot.slane %v357, 4
    %v359 = vadd.f32 %v357, %v358
    %v360 = vrot.slane %v359, 2
    %v361 = vadd.f32 %v359, %v360
    %v362 = vrot.slane %v361, 1
    %v363 = vadd.f32 %v361, %v362
    %v364 = vmul.f32 %v311, %v311
    %v365 = vmul.f32 %v312, %v312
    %v366 = vmul.f32 %v313, %v313
    %v367 = vmul.f32 %v314, %v314
    %v368 = vmul.f32 %v315, %v315
    %v369 = vmul.f32 %v316, %v316
    %v370 = vmul.f32 %v317, %v317
    %v371 = vmul.f32 %v318, %v318
    %v372 = vmul.f32 %v319, %v319
    %v373 = vmul.f32 %v320, %v320
    %v374 = vmul.f32 %v321, %v321
    %v375 = vmul.f32 %v322, %v322
    %v376 = vmul.f32 %v323, %v323
    %v377 = vmul.f32 %v324, %v324
    %v378 = vmul.f32 %v325, %v325
    %v379 = vmul.f32 %v326, %v326
    %v380 = vadd.f32 %v364, %v365
    %v381 = vadd.f32 %v380, %v366
    %v382 = vadd.f32 %v381, %v367
    %v383 = vadd.f32 %v382, %v368
    %v384 = vadd.f32 %v383, %v369
    %v385 = vadd.f32 %v384, %v370
    %v386 = vadd.f32 %v385, %v371
    %v387 = vadd.f32 %v386, %v372
    %v388 = vadd.f32 %v387, %v373
    %v389 = vadd.f32 %v388, %v374
    %v390 = vadd.f32 %v389, %v375
    %v391 = vadd.f32 %v390, %v376
    %v392 = vadd.f32 %v391, %v377
    %v393 = vadd.f32 %v392, %v378
    %v394 = vadd.f32 %v393, %v379
    %v395 = vrot.slane %v394, 4
    %v396 = vadd.f32 %v394, %v395
    %v397 = vrot.slane %v396, 2
    %v398 = vadd.f32 %v396, %v397
    %v399 = vrot.slane %v398, 1
    %v400 = vadd.f32 %v398, %v399
    %p401 = scmp.eq.s32.totalorder 0, 0
    // Predicated region
    $region18: #{downsample_block.7} parent=16 // pred_check
      %p402 = pneg %p401
    $region19: #{downsample_block.7} parent=16 // pred_check_branch
      %404 = sbr.rel (%p402) target = $region21
    $region20: #{downsample_block.7} parent=16 // pred_region
      %405 = vst [vmem:[%s3] sm:$0x1] %v363
      %406 = vst [vmem:[%s4] sm:$0x1] %v400
    $region21: #{downsample_block.7} parent=16 // pred_fallthru
      _
    %p407 = scmp.ne.s32.totalorder 0, 0
    // Predicated region
    $region22: #{downsample_block.7} parent=16 // pred_check
      %p408 = pneg %p407
    $region23: #{downsample_block.7} parent=16 // pred_check_branch
      %410 = sbr.rel (%p408) target = $region25
    $region24: #{downsample_block.7} parent=16 // pred_region
      %v411 = vld [vmem:[%s3] sm:$0x1]
      %v412 = vadd.f32 %v411, %v363
      %413 = vst [vmem:[%s3] sm:$0x1] %v412
      %v414 = vld [vmem:[%s4] sm:$0x1]
      %v415 = vadd.f32 %v414, %v400
      %416 = vst [vmem:[%s4] sm:$0x1] %v415
    $region25: #{downsample_block.7} parent=16 // pred_fallthru
      _
  $region17: #{downsample_block.7} parent=0 // pred_fallthru
    _
  // Predicated region
  $region26: #{downsample_block.7} parent=0 // pred_check
    _
  $region27: #{downsample_block.7} parent=0 // pred_check_branch
    %418 = sbr.rel (0) target = $region29
  $region28: #{downsample_block.7} parent=0 // pred_region
    _
  $region29: #{downsample_block.7} parent=0 // pred_fallthru
    _
  // Predicated region
  $region30: #{downsample_block.7} parent=0 // pred_check
    _
  $region31: #{downsample_block.7} parent=0 // pred_check_branch
    %420 = sbr.rel (0) target = $region33
  $region32: #{downsample_block.7} parent=0 // pred_region
    _
  $region33: #{downsample_block.7} parent=0 // pred_fallthru
    _
  // Predicated region
  $region34: #{downsample_block.7} parent=0 // pred_check
    _
  $region35: #{downsample_block.7} parent=0 // pred_check_branch
    %422 = sbr.rel (0) target = $region37
  $region36: #{downsample_block.7} parent=0 // pred_region
    _
  $region37: #{downsample_block.7} parent=0 // pred_fallthru
    _
  // Predicated region
  $region38: #{downsample_block.7} parent=0 // pred_check
    _
  $region39: #{downsample_block.7} parent=0 // pred_check_branch
    %424 = sbr.rel (0) target = $region41
  $region40: #{downsample_block.7} parent=0 // pred_region
    _
  $region41: #{downsample_block.7} parent=0 // pred_fallthru
    _
  // Predicated region
  $region42: #{downsample_block.7} parent=0 // pred_check
    _
  $region43: #{downsample_block.7} parent=0 // pred_check_branch
    %426 = sbr.rel (0) target = $region45
  $region44: #{downsample_block.7} parent=0 // pred_region
    _
  $region45: #{downsample_block.7} parent=0 // pred_fallthru
    _
  // Predicated region
  $region46: #{downsample_block.7} parent=0 // pred_check
    _
  $region47: #{downsample_block.7} parent=0 // pred_check_branch
    %428 = sbr.rel (0) target = $region49
  $region48: #{downsample_block.7} parent=0 // pred_region
    _
  $region49: #{downsample_block.7} parent=0 // pred_fallthru
    _

// kernel: downsample_block.8
$region0: #{downsample_block.8}
  #allocation0 [shape = 'u32[]', space=smem, size = 0x4, offset = 0x4, fixed_abs, tag = 'smem constant byte address 0x4 - core index']
  #allocation1 [shape = 'u32[144,128]{1,0:T(1,128)}', space=vmem, size = 0x12000, scoped, tag = 'internal scratch']
  %s0 = inlined_call_operand.vmem [shape: f32[128,128], index: 0, kind: input, shape index: {}]
  %s1 = inlined_call_operand.vmem [shape: f32[1,128], index: 1, kind: input, shape index: {}]
  %s2 = inlined_call_operand.vmem [shape: f32[1,128], index: 2, kind: input, shape index: {}]
  %s3 = inlined_call_operand.vmem [shape: bf16[128,128], index: 3, kind: output, shape index: {}]
  %s4 = sld [smem:[#allocation0]]
  $region22: #{downsample_block.8} parent=0
    _
  %s6 = ssub.s32 1, %s4
  %s7 = scalar_select 0, %s6, %s4
  // Predicated region
  $region2: #{downsample_block.8} parent=0 // pred_check
    _
  $region3: #{downsample_block.8} parent=0 // pred_check_branch
    %9 = sbr.rel (0) target = $region5
  $region4: #{downsample_block.8} parent=0 // pred_region
    _
  $region5: #{downsample_block.8} parent=0 // pred_fallthru
    _
  // Predicated region
  $region6: #{downsample_block.8} parent=0 // pred_check
    _
  $region7: #{downsample_block.8} parent=0 // pred_check_branch
    %11 = sbr.rel (0) target = $region9
  $region8: #{downsample_block.8} parent=0 // pred_region
    _
  $region9: #{downsample_block.8} parent=0 // pred_fallthru
    _
  // Predicated region
  $region10: #{downsample_block.8} parent=0 // pred_check
    _
  $region11: #{downsample_block.8} parent=0 // pred_check_branch
    %13 = sbr.rel (0) target = $region13
  $region12: #{downsample_block.8} parent=0 // pred_region
    _
  $region13: #{downsample_block.8} parent=0 // pred_fallthru
    _
  %v14 = vld [vmem:[%s0] sm:$0xff]
  %v15 = vld [vmem:[%s0 + $0x8] sm:$0xff]
  %v16 = vld [vmem:[%s0 + $0x10] sm:$0xff]
  %v17 = vld [vmem:[%s0 + $0x18] sm:$0xff]
  %v18 = vld [vmem:[%s0 + $0x20] sm:$0xff]
  %v19 = vld [vmem:[%s0 + $0x28] sm:$0xff]
  %v20 = vld [vmem:[%s0 + $0x30] sm:$0xff]
  %v21 = vld [vmem:[%s0 + $0x38] sm:$0xff]
  %v22 = vld [vmem:[%s0 + $0x40] sm:$0xff]
  %v23 = vld [vmem:[%s0 + $0x48] sm:$0xff]
  %v24 = vld [vmem:[%s0 + $0x50] sm:$0xff]
  %v25 = vld [vmem:[%s0 + $0x58] sm:$0xff]
  %v26 = vld [vmem:[%s0 + $0x60] sm:$0xff]
  %v27 = vld [vmem:[%s0 + $0x68] sm:$0xff]
  %v28 = vld [vmem:[%s0 + $0x70] sm:$0xff]
  %v29 = vld [vmem:[%s0 + $0x78] sm:$0xff]
  %v30 = vld [vmem:[%s1] sm:$0x1]
  %v32 = vlaneseq
  %v33 = vshrl.u32 %v32, 7
  %v34 = vsub.s32 0, %v33
  %v35 = vrot.slane %v30, %v34
  %v37 = vsub.f32 %v14, %v35
  %v38 = vsub.f32 %v15, %v35
  %v39 = vsub.f32 %v16, %v35
  %v40 = vsub.f32 %v17, %v35
  %v41 = vsub.f32 %v18, %v35
  %v42 = vsub.f32 %v19, %v35
  %v43 = vsub.f32 %v20, %v35
  %v44 = vsub.f32 %v21, %v35
  %v45 = vsub.f32 %v22, %v35
  %v46 = vsub.f32 %v23, %v35
  %v47 = vsub.f32 %v24, %v35
  %v48 = vsub.f32 %v25, %v35
  %v49 = vsub.f32 %v26, %v35
  %v50 = vsub.f32 %v27, %v35
  %v51 = vsub.f32 %v28, %v35
  %v52 = vsub.f32 %v29, %v35
  %v53 = vld [vmem:[%s2] sm:$0x1]
  %v55 = vlaneseq
  %v56 = vshrl.u32 %v55, 7
  %v57 = vsub.s32 0, %v56
  %v58 = vrot.slane %v53, %v57
  %v60 = vmul.f32 %v37, %v58
  %v61 = vmul.f32 %v38, %v58
  %v62 = vmul.f32 %v39, %v58
  %v63 = vmul.f32 %v40, %v58
  %v64 = vmul.f32 %v41, %v58
  %v65 = vmul.f32 %v42, %v58
  %v66 = vmul.f32 %v43, %v58
  %v67 = vmul.f32 %v44, %v58
  %v68 = vmul.f32 %v45, %v58
  %v69 = vmul.f32 %v46, %v58
  %v70 = vmul.f32 %v47, %v58
  %v71 = vmul.f32 %v48, %v58
  %v72 = vmul.f32 %v49, %v58
  %v73 = vmul.f32 %v50, %v58
  %v74 = vmul.f32 %v51, %v58
  %v75 = vmul.f32 %v52, %v58
  %v76 = vmax.f32 %v60, 0.0
  %v77 = vmax.f32 %v61, 0.0
  %v78 = vmax.f32 %v62, 0.0
  %v79 = vmax.f32 %v63, 0.0
  %v80 = vmax.f32 %v64, 0.0
  %v81 = vmax.f32 %v65, 0.0
  %v82 = vmax.f32 %v66, 0.0
  %v83 = vmax.f32 %v67, 0.0
  %v84 = vmax.f32 %v68, 0.0
  %v85 = vmax.f32 %v69, 0.0
  %v86 = vmax.f32 %v70, 0.0
  %v87 = vmax.f32 %v71, 0.0
  %v88 = vmax.f32 %v72, 0.0
  %v89 = vmax.f32 %v73, 0.0
  %v90 = vmax.f32 %v74, 0.0
  %v91 = vmax.f32 %v75, 0.0
  %v92 = vmin.f32 %v76, 6.0
  %v93 = vmin.f32 %v77, 6.0
  %v94 = vmin.f32 %v78, 6.0
  %v95 = vmin.f32 %v79, 6.0
  %v96 = vmin.f32 %v80, 6.0
  %v97 = vmin.f32 %v81, 6.0
  %v98 = vmin.f32 %v82, 6.0
  %v99 = vmin.f32 %v83, 6.0
  %v100 = vmin.f32 %v84, 6.0
  %v101 = vmin.f32 %v85, 6.0
  %v102 = vmin.f32 %v86, 6.0
  %v103 = vmin.f32 %v87, 6.0
  %v104 = vmin.f32 %v88, 6.0
  %v105 = vmin.f32 %v89, 6.0
  %v106 = vmin.f32 %v90, 6.0
  %v107 = vmin.f32 %v91, 6.0
  %v108 = vround.ne.pseudo %v92
  %v109 = vround.ne.pseudo %v93
  %v110 = vround.ne.pseudo %v94
  %v111 = vround.ne.pseudo %v95
  %v112 = vround.ne.pseudo %v96
  %v113 = vround.ne.pseudo %v97
  %v114 = vround.ne.pseudo %v98
  %v115 = vround.ne.pseudo %v99
  %v116 = vround.ne.pseudo %v100
  %v117 = vround.ne.pseudo %v101
  %v118 = vround.ne.pseudo %v102
  %v119 = vround.ne.pseudo %v103
  %v120 = vround.ne.pseudo %v104
  %v121 = vround.ne.pseudo %v105
  %v122 = vround.ne.pseudo %v106
  %v123 = vround.ne.pseudo %v107
  %v124 = vpack.c.bf16 %v109, %v108
  %v125 = vpack.c.bf16 %v111, %v110
  %v126 = vpack.c.bf16 %v113, %v112
  %v127 = vpack.c.bf16 %v115, %v114
  %v128 = vpack.c.bf16 %v117, %v116
  %v129 = vpack.c.bf16 %v119, %v118
  %v130 = vpack.c.bf16 %v121, %v120
  %v131 = vpack.c.bf16 %v123, %v122
  %v140 = vunpack.c.l.b16 %v124
  %v141 = vunpack.c.h.b16 %v124
  %v142 = vunpack.c.l.b16 %v125
  %v143 = vunpack.c.h.b16 %v125
  %v144 = vunpack.c.l.b16 %v126
  %v145 = vunpack.c.h.b16 %v126
  %v146 = vunpack.c.l.b16 %v127
  %v147 = vunpack.c.h.b16 %v127
  %v148 = vunpack.c.l.b16 %v128
  %v149 = vunpack.c.h.b16 %v128
  %v150 = vunpack.c.l.b16 %v129
  %v151 = vunpack.c.h.b16 %v129
  %v152 = vunpack.c.l.b16 %v130
  %v153 = vunpack.c.h.b16 %v130
  %v154 = vunpack.c.l.b16 %v131
  %v155 = vunpack.c.h.b16 %v131
  %v156 = vpack.c.b16 %v140, %v140
  %v157 = vpack.c.b16 %v141, %v141
  %v158 = vpack.c.b16 %v142, %v142
  %v159 = vpack.c.b16 %v143, %v143
  %v160 = vpack.c.b16 %v144, %v144
  %v161 = vpack.c.b16 %v145, %v145
  %v162 = vpack.c.b16 %v146, %v146
  %v163 = vpack.c.b16 %v147, %v147
  %v164 = vpack.c.b16 %v148, %v148
  %v165 = vpack.c.b16 %v149, %v149
  %v166 = vpack.c.b16 %v150, %v150
  %v167 = vpack.c.b16 %v151, %v151
  %v168 = vpack.c.b16 %v152, %v152
  %v169 = vpack.c.b16 %v153, %v153
  %v170 = vpack.c.b16 %v154, %v154
  %v171 = vpack.c.b16 %v155, %v155
  %188 = vst [vmem:[%s3] sm:$0xf] %v156
  %189 = vst [vmem:[%s3 + $0x4] sm:$0xf] %v157
  %190 = vst [vmem:[%s3 + $0x8] sm:$0xf] %v158
  %191 = vst [vmem:[%s3 + $0xc] sm:$0xf] %v159
  %192 = vst [vmem:[%s3 + $0x10] sm:$0xf] %v160
  %193 = vst [vmem:[%s3 + $0x14] sm:$0xf] %v161
  %194 = vst [vmem:[%s3 + $0x18] sm:$0xf] %v162
  %195 = vst [vmem:[%s3 + $0x1c] sm:$0xf] %v163
  %196 = vst [vmem:[%s3 + $0x20] sm:$0xf] %v164
  %197 = vst [vmem:[%s3 + $0x24] sm:$0xf] %v165
  %198 = vst [vmem:[%s3 + $0x28] sm:$0xf] %v166
  %199 = vst [vmem:[%s3 + $0x2c] sm:$0xf] %v167
  %200 = vst [vmem:[%s3 + $0x30] sm:$0xf] %v168
  %201 = vst [vmem:[%s3 + $0x34] sm:$0xf] %v169
  %202 = vst [vmem:[%s3 + $0x38] sm:$0xf] %v170
  %203 = vst [vmem:[%s3 + $0x3c] sm:$0xf] %v171
  // Predicated region
  $region14: #{downsample_block.8} parent=0 // pred_check
    _
  $region15: #{downsample_block.8} parent=0 // pred_check_branch
    %205 = sbr.rel (0) target = $region17
  $region16: #{downsample_block.8} parent=0 // pred_region
    _
  $region17: #{downsample_block.8} parent=0 // pred_fallthru
    _
  // Predicated region
  $region18: #{downsample_block.8} parent=0 // pred_check
    _
  $region19: #{downsample_block.8} parent=0 // pred_check_branch
    %207 = sbr.rel (0) target = $region21
  $region20: #{downsample_block.8} parent=0 // pred_region
    _
  $region21: #{downsample_block.8} parent=0 // pred_fallthru
    _

// kernel: downsample_block.9
$region0: #{downsample_block.9}
  #allocation0 [shape = 'u32[]', space=smem, size = 0x4, offset = 0x4, fixed_abs, tag = 'smem constant byte address 0x4 - core index']
  #allocation1 [shape = 'u32[144,128]{1,0:T(1,128)}', space=vmem, size = 0x12000, scoped, tag = 'internal scratch']
  #allocation2 [shape = 'f32[128,128]{1,0:T(8,128)}', space=vmem, size = 0x10000, scoped, tag = 'scratch operand']
  %s0 = inlined_call_operand.vmem [shape: bf16[128,128], index: 0, kind: input, shape index: {}]
  %s1 = inlined_call_operand.vmem [shape: bf16[128,128], index: 1, kind: input, shape index: {}]
  %s2 = inlined_call_operand.vmem [shape: f32[128,128], index: 2, kind: input, shape index: {}]
  %s3 = inlined_call_operand.hbm [shape: f32[128,128], index: 3, kind: output, shape index: {}]
  %s4 = sld [smem:[#allocation0]]
  $region30: #{downsample_block.9} parent=0
    _
  %s6 = ssub.s32 1, %s4
  %s7 = scalar_select 0, %s6, %s4
  $region1: #{downsample_block.9} parent=0
    #allocation3 [shape = 'u8[65536]{0}', space=vmem, size = 0x10000, scoped, tag = 'output window, operand 0, single buffered']
    #allocation4 [shape = 's32[1]{0}', space=sflag, size = 0x4, scoped, tag = 'scoped memory for downsample_block.9']
    %8 = vsyncpa [#allocation4], 0
    // Predicated region
    $region2: #{downsample_block.9} parent=1 // pred_check
      _
    $region3: #{downsample_block.9} parent=1 // pred_check_branch
      %10 = sbr.rel (0) target = $region5
    $region4: #{downsample_block.9} parent=1 // pred_region
      _
    $region5: #{downsample_block.9} parent=1 // pred_fallthru
      _
    // Predicated region
    $region6: #{downsample_block.9} parent=1 // pred_check
      _
    $region7: #{downsample_block.9} parent=1 // pred_check_branch
      %12 = sbr.rel (0) target = $region9
    $region8: #{downsample_block.9} parent=1 // pred_region
      _
    $region9: #{downsample_block.9} parent=1 // pred_fallthru
      _
    // Predicated region
    $region10: #{downsample_block.9} parent=1 // pred_check
      _
    $region11: #{downsample_block.9} parent=1 // pred_check_branch
      %14 = sbr.rel (0) target = $region13
    $region12: #{downsample_block.9} parent=1 // pred_region
      _
    $region13: #{downsample_block.9} parent=1 // pred_fallthru
      _
    %p16 = scmp.eq.s32.totalorder 0, 0
    // Predicated region
    $region14: #{downsample_block.9} parent=1 // pred_check
      %p17 = pneg %p16
    $region15: #{downsample_block.9} parent=1 // pred_check_branch
      %19 = sbr.rel (%p17) target = $region17
    $region16: #{downsample_block.9} parent=1 // pred_region
      %20 = vst [vmem:[#allocation2] sm:$0xff] 0.0
      %21 = vst [vmem:[#allocation2 + $0x8] sm:$0xff] 0.0
      %22 = vst [vmem:[#allocation2 + $0x10] sm:$0xff] 0.0
      %23 = vst [vmem:[#allocation2 + $0x18] sm:$0xff] 0.0
      %24 = vst [vmem:[#allocation2 + $0x20] sm:$0xff] 0.0
      %25 = vst [vmem:[#allocation2 + $0x28] sm:$0xff] 0.0
      %26 = vst [vmem:[#allocation2 + $0x30] sm:$0xff] 0.0
      %27 = vst [vmem:[#allocation2 + $0x38] sm:$0xff] 0.0
      %28 = vst [vmem:[#allocation2 + $0x40] sm:$0xff] 0.0
      %29 = vst [vmem:[#allocation2 + $0x48] sm:$0xff] 0.0
      %30 = vst [vmem:[#allocation2 + $0x50] sm:$0xff] 0.0
      %31 = vst [vmem:[#allocation2 + $0x58] sm:$0xff] 0.0
      %32 = vst [vmem:[#allocation2 + $0x60] sm:$0xff] 0.0
      %33 = vst [vmem:[#allocation2 + $0x68] sm:$0xff] 0.0
      %34 = vst [vmem:[#allocation2 + $0x70] sm:$0xff] 0.0
      %35 = vst [vmem:[#allocation2 + $0x78] sm:$0xff] 0.0
    $region17: #{downsample_block.9} parent=1 // pred_fallthru
      _
    %v36 = vld [vmem:[#allocation2] sm:$0xff]
    %v37 = vld [vmem:[#allocation2 + $0x8] sm:$0xff]
    %v38 = vld [vmem:[#allocation2 + $0x10] sm:$0xff]
    %v39 = vld [vmem:[#allocation2 + $0x18] sm:$0xff]
    %v40 = vld [vmem:[#allocation2 + $0x20] sm:$0xff]
    %v41 = vld [vmem:[#allocation2 + $0x28] sm:$0xff]
    %v42 = vld [vmem:[#allocation2 + $0x30] sm:$0xff]
    %v43 = vld [vmem:[#allocation2 + $0x38] sm:$0xff]
    %v44 = vld [vmem:[#allocation2 + $0x40] sm:$0xff]
    %v45 = vld [vmem:[#allocation2 + $0x48] sm:$0xff]
    %v46 = vld [vmem:[#allocation2 + $0x50] sm:$0xff]
    %v47 = vld [vmem:[#allocation2 + $0x58] sm:$0xff]
    %v48 = vld [vmem:[#allocation2 + $0x60] sm:$0xff]
    %v49 = vld [vmem:[#allocation2 + $0x68] sm:$0xff]
    %v50 = vld [vmem:[#allocation2 + $0x70] sm:$0xff]
    %v51 = vld [vmem:[#allocation2 + $0x78] sm:$0xff]
    %v52 = vld [vmem:[%s0] sm:$0xf]
    %v53 = vld [vmem:[%s0 + $0x4] sm:$0xf]
    %v54 = vld [vmem:[%s0 + $0x8] sm:$0xf]
    %v55 = vld [vmem:[%s0 + $0xc] sm:$0xf]
    %v56 = vld [vmem:[%s0 + $0x10] sm:$0xf]
    %v57 = vld [vmem:[%s0 + $0x14] sm:$0xf]
    %v58 = vld [vmem:[%s0 + $0x18] sm:$0xf]
    %v59 = vld [vmem:[%s0 + $0x1c] sm:$0xf]
    %v60 = vld [vmem:[%s0 + $0x20] sm:$0xf]
    %v61 = vld [vmem:[%s0 + $0x24] sm:$0xf]
    %v62 = vld [vmem:[%s0 + $0x28] sm:$0xf]
    %v63 = vld [vmem:[%s0 + $0x2c] sm:$0xf]
    %v64 = vld [vmem:[%s0 + $0x30] sm:$0xf]
    %v65 = vld [vmem:[%s0 + $0x34] sm:$0xf]
    %v66 = vld [vmem:[%s0 + $0x38] sm:$0xf]
    %v67 = vld [vmem:[%s0 + $0x3c] sm:$0xf]
    %v68 = vld [vmem:[%s1] sm:$0xf]
    %v69 = vld [vmem:[%s1 + $0x4] sm:$0xf]
    %v70 = vld [vmem:[%s1 + $0x8] sm:$0xf]
    %v71 = vld [vmem:[%s1 + $0xc] sm:$0xf]
    %v72 = vld [vmem:[%s1 + $0x10] sm:$0xf]
    %v73 = vld [vmem:[%s1 + $0x14] sm:$0xf]
    %v74 = vld [vmem:[%s1 + $0x18] sm:$0xf]
    %v75 = vld [vmem:[%s1 + $0x1c] sm:$0xf]
    %v76 = vld [vmem:[%s1 + $0x20] sm:$0xf]
    %v77 = vld [vmem:[%s1 + $0x24] sm:$0xf]
    %v78 = vld [vmem:[%s1 + $0x28] sm:$0xf]
    %v79 = vld [vmem:[%s1 + $0x2c] sm:$0xf]
    %v80 = vld [vmem:[%s1 + $0x30] sm:$0xf]
    %v81 = vld [vmem:[%s1 + $0x34] sm:$0xf]
    %v82 = vld [vmem:[%s1 + $0x38] sm:$0xf]
    %v83 = vld [vmem:[%s1 + $0x3c] sm:$0xf]
    %v100 = vunpack.c.l.b16 %v52
    %v101 = vunpack.c.l.b16 %v53
    %v102 = vunpack.c.l.b16 %v54
    %v103 = vunpack.c.l.b16 %v55
    %v104 = vunpack.c.l.b16 %v56
    %v105 = vunpack.c.l.b16 %v57
    %v106 = vunpack.c.l.b16 %v58
    %v107 = vunpack.c.l.b16 %v59
    %v108 = vunpack.c.l.b16 %v60
    %v109 = vunpack.c.l.b16 %v61
    %v110 = vunpack.c.l.b16 %v62
    %v111 = vunpack.c.l.b16 %v63
    %v112 = vunpack.c.l.b16 %v64
    %v113 = vunpack.c.l.b16 %v65
    %v114 = vunpack.c.l.b16 %v66
    %v115 = vunpack.c.l.b16 %v67
    %v116 = vpack.c.b16 %v101, %v100
    %v117 = vpack.c.b16 %v103, %v102
    %v118 = vpack.c.b16 %v105, %v104
    %v119 = vpack.c.b16 %v107, %v106
    %v120 = vpack.c.b16 %v109, %v108
    %v121 = vpack.c.b16 %v111, %v110
    %v122 = vpack.c.b16 %v113, %v112
    %v123 = vpack.c.b16 %v115, %v114
    %v148 = vunpack.c.l.b16 %v68
    %v149 = vunpack.c.l.b16 %v69
    %v150 = vunpack.c.l.b16 %v70
    %v151 = vunpack.c.l.b16 %v71
    %v152 = vunpack.c.l.b16 %v72
    %v153 = vunpack.c.l.b16 %v73
    %v154 = vunpack.c.l.b16 %v74
    %v155 = vunpack.c.l.b16 %v75
    %v156 = vunpack.c.l.b16 %v76
    %v157 = vunpack.c.l.b16 %v77
    %v158 = vunpack.c.l.b16 %v78
    %v159 = vunpack.c.l.b16 %v79
    %v160 = vunpack.c.l.b16 %v80
    %v161 = vunpack.c.l.b16 %v81
    %v162 = vunpack.c.l.b16 %v82
    %v163 = vunpack.c.l.b16 %v83
    %v164 = vpack.c.b16 %v149, %v148
    %v165 = vpack.c.b16 %v151, %v150
    %v166 = vpack.c.b16 %v153, %v152
    %v167 = vpack.c.b16 %v155, %v154
    %v168 = vpack.c.b16 %v157, %v156
    %v169 = vpack.c.b16 %v159, %v158
    %v170 = vpack.c.b16 %v161, %v160
    %v171 = vpack.c.b16 %v163, %v162
    %180 = vmatprep.subr.bf16.mxu0 0
    %181 = vmatpush1.bf16.msra.mxu0 %v171
    %182 = vmatprep.subr.bf16.mxu0 0
    %183 = vmatpush1.bf16.msra.mxu0 %v170
    %184 = vmatprep.subr.bf16.mxu0 0
    %185 = vmatpush1.bf16.msra.mxu0 %v169
    %186 = vmatprep.subr.bf16.mxu0 0
    %187 = vmatpush1.bf16.msra.mxu0 %v168
    %188 = vmatprep.subr.bf16.mxu0 0
    %189 = vmatpush1.bf16.msra.mxu0 %v167
    %190 = vmatprep.subr.bf16.mxu0 0
    %191 = vmatpush1.bf16.msra.mxu0 %v166
    %192 = vmatprep.subr.bf16.mxu0 0
    %193 = vmatpush1.bf16.msra.mxu0 %v165
    %194 = vmatprep.subr.bf16.mxu0 0
    %195 = vmatpush1.bf16.msra.mxu0 %v164
    %196 = vmatprep.subr.bf16.mxu0 0
    %197 = vmatpush2.bf16.msra.mxu0 0
    %198 = vmatprep.subr.bf16.mxu0 0
    %199 = vmatpush2.bf16.msra.mxu0 0
    %200 = vmatprep.subr.bf16.mxu0 0
    %201 = vmatpush2.bf16.msra.mxu0 0
    %202 = vmatprep.subr.bf16.mxu0 0
    %203 = vmatpush2.bf16.msra.mxu0 0
    %204 = vmatprep.subr.bf16.mxu0 0
    %205 = vmatpush2.bf16.msra.mxu0 0
    %206 = vmatprep.subr.bf16.mxu0 0
    %207 = vmatpush2.bf16.msra.mxu0 0
    %208 = vmatprep.subr.bf16.mxu0 0
    %209 = vmatpush2.bf16.msra.mxu0 0
    %210 = vmatprep.subr.bf16.mxu0 0
    %211 = vmatpush2.bf16.msra.mxu0 0
    %212 = vmatprep.mubr.bf16.mxu0 0
    %213 = vmatmul.mubr.bf16.gmra.mxu0 %v116
    %v214 = vpop.f32.mrf.mxu0
    %v215 = vadd.f32 0.0, %v214
    %v216 = vpop.f32.mrf.mxu0
    %v217 = vpop.f32.mrf.mxu0
    %v218 = vadd.f32 0.0, %v217
    %v219 = vpop.f32.mrf.mxu0
    %220 = vmatprep.mubr.bf16.mxu0 0
    %221 = vmatmul.mubr.bf16.gmra.mxu0 %v117
    %v222 = vpop.f32.mrf.mxu0
    %v223 = vadd.f32 0.0, %v222
    %v224 = vpop.f32.mrf.mxu0
    %v225 = vpop.f32.mrf.mxu0
    %v226 = vadd.f32 0.0, %v225
    %v227 = vpop.f32.mrf.mxu0
    %228 = vmatprep.mubr.bf16.mxu0 0
    %229 = vmatmul.mubr.bf16.gmra.mxu0 %v118
    %v230 = vpop.f32.mrf.mxu0
    %v231 = vadd.f32 0.0, %v230
    %v232 = vpop.f32.mrf.mxu0
    %v233 = vpop.f32.mrf.mxu0
    %v234 = vadd.f32 0.0, %v233
    %v235 = vpop.f32.mrf.mxu0
    %236 = vmatprep.mubr.bf16.mxu0 0
    %237 = vmatmul.mubr.bf16.gmra.mxu0 %v119
    %v238 = vpop.f32.mrf.mxu0
    %v239 = vadd.f32 0.0, %v238
    %v240 = vpop.f32.mrf.mxu0
    %v241 = vpop.f32.mrf.mxu0
    %v242 = vadd.f32 0.0, %v241
    %v243 = vpop.f32.mrf.mxu0
    %244 = vmatprep.mubr.bf16.mxu0 0
    %245 = vmatmul.mubr.bf16.gmra.mxu0 %v120
    %v246 = vpop.f32.mrf.mxu0
    %v247 = vadd.f32 0.0, %v246
    %v248 = vpop.f32.mrf.mxu0
    %v249 = vpop.f32.mrf.mxu0
    %v250 = vadd.f32 0.0, %v249
    %v251 = vpop.f32.mrf.mxu0
    %252 = vmatprep.mubr.bf16.mxu0 0
    %253 = vmatmul.mubr.bf16.gmra.mxu0 %v121
    %v254 = vpop.f32.mrf.mxu0
    %v255 = vadd.f32 0.0, %v254
    %v256 = vpop.f32.mrf.mxu0
    %v257 = vpop.f32.mrf.mxu0
    %v258 = vadd.f32 0.0, %v257
    %v259 = vpop.f32.mrf.mxu0
    %260 = vmatprep.mubr.bf16.mxu0 0
    %261 = vmatmul.mubr.bf16.gmra.mxu0 %v122
    %v262 = vpop.f32.mrf.mxu0
    %v263 = vadd.f32 0.0, %v262
    %v264 = vpop.f32.mrf.mxu0
    %v265 = vpop.f32.mrf.mxu0
    %v266 = vadd.f32 0.0, %v265
    %v267 = vpop.f32.mrf.mxu0
    %268 = vmatprep.mubr.bf16.mxu0 0
    %269 = vmatmul.mubr.bf16.gmra.mxu0 %v123
    %v270 = vpop.f32.mrf.mxu0
    %v271 = vadd.f32 0.0, %v270
    %v272 = vpop.f32.mrf.mxu0
    %v273 = vpop.f32.mrf.mxu0
    %v274 = vadd.f32 0.0, %v273
    %v275 = vpop.f32.mrf.mxu0
    %276 = vdwg.mxu0
    %v277 = vadd.f32 %v36, %v215
    %v278 = vadd.f32 %v37, %v218
    %v279 = vadd.f32 %v38, %v223
    %v280 = vadd.f32 %v39, %v226
    %v281 = vadd.f32 %v40, %v231
    %v282 = vadd.f32 %v41, %v234
    %v283 = vadd.f32 %v42, %v239
    %v284 = vadd.f32 %v43, %v242
    %v285 = vadd.f32 %v44, %v247
    %v286 = vadd.f32 %v45, %v250
    %v287 = vadd.f32 %v46, %v255
    %v288 = vadd.f32 %v47, %v258
    %v289 = vadd.f32 %v48, %v263
    %v290 = vadd.f32 %v49, %v266
    %v291 = vadd.f32 %v50, %v271
    %v292 = vadd.f32 %v51, %v274
    %293 = vst [vmem:[#allocation2] sm:$0xff] %v277
    %294 = vst [vmem:[#allocation2 + $0x8] sm:$0xff] %v278
    %295 = vst [vmem:[#allocation2 + $0x10] sm:$0xff] %v279
    %296 = vst [vmem:[#allocation2 + $0x18] sm:$0xff] %v280
    %297 = vst [vmem:[#allocation2 + $0x20] sm:$0xff] %v281
    %298 = vst [vmem:[#allocation2 + $0x28] sm:$0xff] %v282
    %299 = vst [vmem:[#allocation2 + $0x30] sm:$0xff] %v283
    %300 = vst [vmem:[#allocation2 + $0x38] sm:$0xff] %v284
    %301 = vst [vmem:[#allocation2 + $0x40] sm:$0xff] %v285
    %302 = vst [vmem:[#allocation2 + $0x48] sm:$0xff] %v286
    %303 = vst [vmem:[#allocation2 + $0x50] sm:$0xff] %v287
    %304 = vst [vmem:[#allocation2 + $0x58] sm:$0xff] %v288
    %305 = vst [vmem:[#allocation2 + $0x60] sm:$0xff] %v289
    %306 = vst [vmem:[#allocation2 + $0x68] sm:$0xff] %v290
    %307 = vst [vmem:[#allocation2 + $0x70] sm:$0xff] %v291
    %308 = vst [vmem:[#allocation2 + $0x78] sm:$0xff] %v292
    // Predicated region
    $region18: #{downsample_block.9} parent=1 // pred_check
      %p309 = pneg %p16
    $region19: #{downsample_block.9} parent=1 // pred_check_branch
      %311 = sbr.rel (%p309) target = $region21
    $region20: #{downsample_block.9} parent=1 // pred_region
      %v312 = vld [vmem:[#allocation2] sm:$0xff]
      %v313 = vld [vmem:[#allocation2 + $0x8] sm:$0xff]
      %v314 = vld [vmem:[#allocation2 + $0x10] sm:$0xff]
      %v315 = vld [vmem:[#allocation2 + $0x18] sm:$0xff]
      %v316 = vld [vmem:[#allocation2 + $0x20] sm:$0xff]
      %v317 = vld [vmem:[#allocation2 + $0x28] sm:$0xff]
      %v318 = vld [vmem:[#allocation2 + $0x30] sm:$0xff]
      %v319 = vld [vmem:[#allocation2 + $0x38] sm:$0xff]
      %v320 = vld [vmem:[#allocation2 + $0x40] sm:$0xff]
      %v321 = vld [vmem:[#allocation2 + $0x48] sm:$0xff]
      %v322 = vld [vmem:[#allocation2 + $0x50] sm:$0xff]
      %v323 = vld [vmem:[#allocation2 + $0x58] sm:$0xff]
      %v324 = vld [vmem:[#allocation2 + $0x60] sm:$0xff]
      %v325 = vld [vmem:[#allocation2 + $0x68] sm:$0xff]
      %v326 = vld [vmem:[#allocation2 + $0x70] sm:$0xff]
      %v327 = vld [vmem:[#allocation2 + $0x78] sm:$0xff]
      %v328 = vld [vmem:[%s2] sm:$0xff]
      %v329 = vld [vmem:[%s2 + $0x8] sm:$0xff]
      %v330 = vld [vmem:[%s2 + $0x10] sm:$0xff]
      %v331 = vld [vmem:[%s2 + $0x18] sm:$0xff]
      %v332 = vld [vmem:[%s2 + $0x20] sm:$0xff]
      %v333 = vld [vmem:[%s2 + $0x28] sm:$0xff]
      %v334 = vld [vmem:[%s2 + $0x30] sm:$0xff]
      %v335 = vld [vmem:[%s2 + $0x38] sm:$0xff]
      %v336 = vld [vmem:[%s2 + $0x40] sm:$0xff]
      %v337 = vld [vmem:[%s2 + $0x48] sm:$0xff]
      %v338 = vld [vmem:[%s2 + $0x50] sm:$0xff]
      %v339 = vld [vmem:[%s2 + $0x58] sm:$0xff]
      %v340 = vld [vmem:[%s2 + $0x60] sm:$0xff]
      %v341 = vld [vmem:[%s2 + $0x68] sm:$0xff]
      %v342 = vld [vmem:[%s2 + $0x70] sm:$0xff]
      %v343 = vld [vmem:[%s2 + $0x78] sm:$0xff]
      %v344 = vadd.f32 %v312, %v328
      %v345 = vadd.f32 %v313, %v329
      %v346 = vadd.f32 %v314, %v330
      %v347 = vadd.f32 %v315, %v331
      %v348 = vadd.f32 %v316, %v332
      %v349 = vadd.f32 %v317, %v333
      %v350 = vadd.f32 %v318, %v334
      %v351 = vadd.f32 %v319, %v335
      %v352 = vadd.f32 %v320, %v336
      %v353 = vadd.f32 %v321, %v337
      %v354 = vadd.f32 %v322, %v338
      %v355 = vadd.f32 %v323, %v339
      %v356 = vadd.f32 %v324, %v340
      %v357 = vadd.f32 %v325, %v341
      %v358 = vadd.f32 %v326, %v342
      %v359 = vadd.f32 %v327, %v343
      %360 = vst [vmem:[#allocation2] sm:$0xff] %v344
      %361 = vst [vmem:[#allocation2 + $0x8] sm:$0xff] %v345
      %362 = vst [vmem:[#allocation2 + $0x10] sm:$0xff] %v346
      %363 = vst [vmem:[#allocation2 + $0x18] sm:$0xff] %v347
      %364 = vst [vmem:[#allocation2 + $0x20] sm:$0xff] %v348
      %365 = vst [vmem:[#allocation2 + $0x28] sm:$0xff] %v349
      %366 = vst [vmem:[#allocation2 + $0x30] sm:$0xff] %v350
      %367 = vst [vmem:[#allocation2 + $0x38] sm:$0xff] %v351
      %368 = vst [vmem:[#allocation2 + $0x40] sm:$0xff] %v352
      %369 = vst [vmem:[#allocation2 + $0x48] sm:$0xff] %v353
      %370 = vst [vmem:[#allocation2 + $0x50] sm:$0xff] %v354
      %371 = vst [vmem:[#allocation2 + $0x58] sm:$0xff] %v355
      %372 = vst [vmem:[#allocation2 + $0x60] sm:$0xff] %v356
      %373 = vst [vmem:[#allocation2 + $0x68] sm:$0xff] %v357
      %374 = vst [vmem:[#allocation2 + $0x70] sm:$0xff] %v358
      %375 = vst [vmem:[#allocation2 + $0x78] sm:$0xff] %v359
      %v376 = vld [vmem:[#allocation2] sm:$0xff]
      %v377 = vld [vmem:[#allocation2 + $0x8] sm:$0xff]
      %v378 = vld [vmem:[#allocation2 + $0x10] sm:$0xff]
      %v379 = vld [vmem:[#allocation2 + $0x18] sm:$0xff]
      %v380 = vld [vmem:[#allocation2 + $0x20] sm:$0xff]
      %v381 = vld [vmem:[#allocation2 + $0x28] sm:$0xff]
      %v382 = vld [vmem:[#allocation2 + $0x30] sm:$0xff]
      %v383 = vld [vmem:[#allocation2 + $0x38] sm:$0xff]
      %v384 = vld [vmem:[#allocation2 + $0x40] sm:$0xff]
      %v385 = vld [vmem:[#allocation2 + $0x48] sm:$0xff]
      %v386 = vld [vmem:[#allocation2 + $0x50] sm:$0xff]
      %v387 = vld [vmem:[#allocation2 + $0x58] sm:$0xff]
      %v388 = vld [vmem:[#allocation2 + $0x60] sm:$0xff]
      %v389 = vld [vmem:[#allocation2 + $0x68] sm:$0xff]
      %v390 = vld [vmem:[#allocation2 + $0x70] sm:$0xff]
      %v391 = vld [vmem:[#allocation2 + $0x78] sm:$0xff]
      %392 = vst [vmem:[#allocation3] sm:$0xff] %v376
      %393 = vst [vmem:[#allocation3 + $0x8] sm:$0xff] %v377
      %394 = vst [vmem:[#allocation3 + $0x10] sm:$0xff] %v378
      %395 = vst [vmem:[#allocation3 + $0x18] sm:$0xff] %v379
      %396 = vst [vmem:[#allocation3 + $0x20] sm:$0xff] %v380
      %397 = vst [vmem:[#allocation3 + $0x28] sm:$0xff] %v381
      %398 = vst [vmem:[#allocation3 + $0x30] sm:$0xff] %v382
      %399 = vst [vmem:[#allocation3 + $0x38] sm:$0xff] %v383
      %400 = vst [vmem:[#allocation3 + $0x40] sm:$0xff] %v384
      %401 = vst [vmem:[#allocation3 + $0x48] sm:$0xff] %v385
      %402 = vst [vmem:[#allocation3 + $0x50] sm:$0xff] %v386
      %403 = vst [vmem:[#allocation3 + $0x58] sm:$0xff] %v387
      %404 = vst [vmem:[#allocation3 + $0x60] sm:$0xff] %v388
      %405 = vst [vmem:[#allocation3 + $0x68] sm:$0xff] %v389
      %406 = vst [vmem:[#allocation3 + $0x70] sm:$0xff] %v390
      %407 = vst [vmem:[#allocation3 + $0x78] sm:$0xff] %v391
    $region21: #{downsample_block.9} parent=1 // pred_fallthru
      _
    // Predicated region
    $region22: #{downsample_block.9} parent=1 // pred_check
      _
    $region23: #{downsample_block.9} parent=1 // pred_check_branch
      %409 = sbr.rel (0) target = $region25
    $region24: #{downsample_block.9} parent=1 // pred_region
      %s411 = ssub.s32 2048, 2048
      %412 = vsyncadd [#allocation4], %s411
      %s413 = sshll.u32 [#allocation3], 4
      %s414 = int_to_ptr.vmem [resolvable:$true] %s413
      %419 = dma.vmem_to_hbm [thread:$0]  %s414, 2048, %s3, [#allocation4], 128, 128, 8
    $region25: #{downsample_block.9} parent=1 // pred_fallthru
      _
    // Predicated region
    $region26: #{downsample_block.9} parent=1 // pred_check
      _
    $region27: #{downsample_block.9} parent=1 // pred_check_branch
      %421 = sbr.rel (0) target = $region29
    $region28: #{downsample_block.9} parent=1 // pred_region
      %422 = dma.done [#allocation4], 2048
    $region29: #{downsample_block.9} parent=1 // pred_fallthru
      _
    %423 = vsyncpa [#allocation4], 1

</llo_original>
